<compile_context>
chip_gen: v7x
topology: tpu7x:2x2x1
jax: 0.10.0
libtpu: 0.0.40
codegen_flags: <defaults>
</compile_context>

<pallas_src>
import math

import jax
import jax.numpy as jnp
import numpy as np
from jax import lax
from jax.experimental import pallas as pl
from jax.experimental.pallas import tpu as pltpu


# ----------------------------------------------------------------------------
# The single fused Pallas kernel
# ----------------------------------------------------------------------------
def _nfd_fused_kernel(x_ref, wrgb_ref, wcomb_ref, b1_ref, wms_ref,
                      w2_ref, b2_ref, wl_ref, bl_ref, o_ref):
    x = x_ref[...]                                                     # (bs, nf*3*HW)

    # ---- minibatch stddev scalar --------------------------------------------
    # feat columns enumerate all (channel, pixel) elements of the from_rgb
    # output (bias omitted: var over batch is invariant to a per-column shift).
    feat = jnp.dot(x, wrgb_ref[...], preferred_element_type=jnp.float32)  # (bs, HW*c8)
    mu = jnp.mean(feat, axis=0, keepdims=True)
    d = feat - mu
    var = jnp.mean(d * d, axis=0, keepdims=True)                       # unbiased=False
    ms = jnp.mean(jnp.sqrt(var + 1e-8))                                # scalar

    # ---- conv1: from_rgb + zero-padded 3x3 im2col folded into one matmul ----
    h1 = jnp.dot(x, wcomb_ref[...], preferred_element_type=jnp.float32)  # (bs, HW*c9)
    h1 = h1 + b1_ref[...] + ms * wms_ref[...]
    h1 = jnp.where(h1 >= 0.0, h1, 0.2 * h1)                            # LeakyReLU(0.2)

    # ---- conv2: 4x4 valid conv over a 4x4 map == full contraction -----------
    h2 = jnp.dot(h1, w2_ref[...], preferred_element_type=jnp.float32) + b2_ref[...]
    h2 = jnp.where(h2 >= 0.0, h2, 0.2 * h2)                            # (bs, c9)

    # ---- EqualLinear(c9, 1) --------------------------------------------------
    o = jnp.dot(h2, wl_ref[...], preferred_element_type=jnp.float32) + bl_ref[...]
    o_ref[...] = o.astype(o_ref.dtype)


def nfd_fused_call(x_flat, fw):
    """x_flat: (bs, nf*3*H*W) f32; fw: folded-weight dict from prepare_folded_weights."""
    bs = x_flat.shape[0]
    args = (x_flat, fw["wrgb_big"], fw["wcomb"], fw["b1"], fw["wms"],
            fw["w2"], fw["b2"], fw["wl"], fw["bl"])
    in_specs = [pl.BlockSpec(a.shape, lambda i: (0, 0)) for a in args]
    return pl.pallas_call(
        _nfd_fused_kernel,
        out_shape=jax.ShapeDtypeStruct((bs, 1), jnp.float32),
        grid=(1,),
        in_specs=in_specs,
        out_specs=pl.BlockSpec((bs, 1), lambda i: (0, 0)),
        compiler_params=pltpu.CompilerParams(dimension_semantics=("arbitrary",)),
    )(*args)


# ----------------------------------------------------------------------------
# Parameters (matches the module's init: normal weights, zero biases)
# ----------------------------------------------------------------------------
def init_params(key, c8, c9, n_frames):
    cf = c8 // n_frames
    k = jax.random.split(key, 4)
    return dict(
        w_rgb=jax.random.normal(k[0], (cf, 3, 1, 1), jnp.float32),     # from_rgb[8]
        b_rgb=jnp.zeros((cf,), jnp.float32),
        w1=jax.random.normal(k[1], (c9, c8 + 1, 3, 3), jnp.float32),   # progression[8].conv1
        b1=jnp.zeros((c9,), jnp.float32),
        w2=jax.random.normal(k[2], (c9, c9, 4, 4), jnp.float32),       # progression[8].conv2
        b2=jnp.zeros((c9,), jnp.float32),
        wl=jax.random.normal(k[3], (1, c9), jnp.float32),              # EqualLinear(C9, 1)
        bl=jnp.zeros((1,), jnp.float32),
    )


# ----------------------------------------------------------------------------
# One-time host-side weight folding (off the per-step activation critical path)
# ----------------------------------------------------------------------------
def _build_selection(H, W):
    """S[p, t, q] = 1 iff output pixel p's 3x3 tap t (pad=1) reads input pixel q."""
    HW = H * W
    S = np.zeros((HW, 9, HW), np.float32)
    for ph in range(H):
        for pw in range(W):
            p = ph * W + pw
            for th in range(3):
                for tw in range(3):
                    sh, sw = ph + th - 1, pw + tw - 1
                    if 0 <= sh < H and 0 <= sw < W:
                        S[p, th * 3 + tw, sh * W + sw] = 1.0
    return jnp.asarray(S)


def prepare_folded_weights(params, n_frames, H=4, W=4):
    HW = H * W
    cf = params["w_rgb"].shape[0]
    c8 = cf * n_frames
    c9 = params["w1"].shape[0]
    cin1 = c8 + 1

    s_rgb = math.sqrt(2.0 / 3.0)            # EqualLR: fan_in = 3*1*1
    s1 = math.sqrt(2.0 / (cin1 * 9))        # fan_in = cin1*3*3
    s2 = math.sqrt(2.0 / (c9 * 16))         # fan_in = c9*4*4
    sl = math.sqrt(2.0 / c9)                # Linear fan_in = c9

    Wp = (params["w_rgb"][:, :, 0, 0] * s_rgb).T                       # (3, cf): [r, k]
    b_rgb = params["b_rgb"]                                            # (cf,)

    S = _build_selection(H, W)                                         # (HW, 9, HW)
    inb = jnp.sum(S, axis=-1)                                          # (HW, 9)

    w1s = params["w1"] * s1                                            # (c9, c8+1, 3, 3)
    W1_feat = w1s[:, :c8].reshape(c9, n_frames, cf, 9)                 # [o, f, k, t]
    W1_ms = w1s[:, c8].reshape(c9, 9)                                  # [o, t]

    # mbstd path: (nf*3*HW) -> (c8*HW); per-pixel block-diagonal 1x1 conv.
    eye_f = jnp.eye(n_frames, dtype=jnp.float32)
    eye_q = jnp.eye(HW, dtype=jnp.float32)
    wrgb_big = jnp.kron(jnp.kron(eye_f, Wp), eye_q)                    # (nf*3*HW, c8*HW)

    # conv1 folded over from_rgb + im2col: rows indexed (f, r, q), cols (p, o).
    wcomb = jnp.einsum("ofkt,ptq,rk->frqpo", W1_feat, S, Wp).reshape(n_frames * 3 * HW, HW * c9)
    # mbstd channel contribution (position-dependent because of zero padding).
    wms = jnp.einsum("ot,pt->po", W1_ms, inb).reshape(1, HW * c9)
    # conv1 bias + folded from_rgb bias contribution.
    b1 = (jnp.broadcast_to(params["b1"][None, :], (HW, c9))
          + jnp.einsum("ofkt,pt,k->po", W1_feat, inb, b_rgb)).reshape(1, HW * c9)

    # conv2 4x4 valid on a 4x4 map: full contraction; rows indexed (p, o).
    w2col = jnp.transpose(params["w2"] * s2, (2, 3, 1, 0)).reshape(HW * c9, c9)

    return dict(
        wrgb_big=wrgb_big, wcomb=wcomb, wms=wms, b1=b1,
        w2=w2col, b2=params["b2"][None, :],
        wl=(params["wl"] * sl).T, bl=params["bl"][None, :],
    )


# ----------------------------------------------------------------------------
# Forward pass: one free reshape + one fused pallas_call
# ----------------------------------------------------------------------------
def nframes_discriminator_forward(folded, x):
    bs = x.shape[0]
    x_flat = x.reshape(bs, -1).astype(jnp.float32)   # contiguous flatten, no transpose
    return nfd_fused_call(x_flat, folded)


# ----------------------------------------------------------------------------
# Pure-JAX reference (lax convolutions) for validation
# ----------------------------------------------------------------------------
def reference_forward(params, x):
    bs, nf = x.shape[:2]

    def conv2d(inp, w, b, pad):
        out = lax.conv_general_dilated(
            inp, w, (1, 1), [(pad, pad), (pad, pad)],
            dimension_numbers=("NCHW", "OIHW", "NCHW"))
        return out + b[None, :, None, None]

    s_rgb = math.sqrt(2.0 / 3.0)
    frames = [conv2d(x[:, f], params["w_rgb"] * s_rgb, params["b_rgb"], 0) for f in range(nf)]
    out = jnp.concatenate(frames, axis=1)
    std = jnp.sqrt(jnp.var(out, axis=0) + 1e-8)
    mean_std = jnp.broadcast_to(jnp.mean(std), (bs, 1, 4, 4))
    out = jnp.concatenate([out, mean_std], axis=1)
    cin1 = out.shape[1]
    h = conv2d(out, params["w1"] * math.sqrt(2.0 / (cin1 * 9)), params["b1"], 1)
    h = jnp.where(h >= 0, h, 0.2 * h)
    c9 = h.shape[1]
    h = conv2d(h, params["w2"] * math.sqrt(2.0 / (c9 * 16)), params["b2"], 0)
    h = jnp.where(h >= 0, h, 0.2 * h)
    h = h[:, :, 0, 0]
    return h @ (params["wl"] * math.sqrt(2.0 / c9)).T + params["bl"][None, :]


if __name__ == "__main__":
    key = jax.random.PRNGKey(0)
    kx, kp = jax.random.split(key)

    bs, n_frames, H, W = 2, 2, 4, 4
    C8, C9 = 32, 64          # synthetic small NFD_CHANNELS[8], NFD_CHANNELS[9]

    x = jax.random.normal(kx, (bs, n_frames, 3, H, W), jnp.float32)
    params = init_params(kp, C8, C9, n_frames)

    # One-time weight folding (host side, off the per-call critical path).
    folded = prepare_folded_weights(params, n_frames, H, W)

    fwd = jax.jit(nframes_discriminator_forward)
    out = jax.block_until_ready(fwd(folded, x))
    assert out.shape == (bs, 1), out.shape

    ref = reference_forward(params, x)
    assert jnp.allclose(out, ref, rtol=1e-3, atol=2e-3), (out, ref)

    print("KERNEL_OK")
</pallas_src>

<mosaic_0001>
module attributes {stable_mosaic.version = 11 : i64} {
  func.func @_nfd_fused_kernel(%arg0: i32, %arg1: memref<2x96xf32, #tpu.memory_space<vmem>>, %arg2: memref<96x512xf32, #tpu.memory_space<vmem>>, %arg3: memref<96x1024xf32, #tpu.memory_space<vmem>>, %arg4: memref<1x1024xf32, #tpu.memory_space<vmem>>, %arg5: memref<1x1024xf32, #tpu.memory_space<vmem>>, %arg6: memref<1024x64xf32, #tpu.memory_space<vmem>>, %arg7: memref<1x64xf32, #tpu.memory_space<vmem>>, %arg8: memref<64x1xf32, #tpu.memory_space<vmem>>, %arg9: memref<1x1xf32, #tpu.memory_space<vmem>>, %arg10: memref<2x1xf32, #tpu.memory_space<vmem>>) attributes {dimension_semantics = [#tpu.dimension_semantics<arbitrary>], iteration_bounds = array<i64: 1>, scalar_prefetch = 0 : i64, scratch_operands = 0 : i64, tpu.core_type = #tpu.core_type<tc>, window_params = [{pipeline_mode = #tpu.pipeline_mode<synchronous>, transform_indices = @transform_0, window_bounds = array<i64: 2, 96>}, {pipeline_mode = #tpu.pipeline_mode<synchronous>, transform_indices = @transform_1, window_bounds = array<i64: 96, 512>}, {pipeline_mode = #tpu.pipeline_mode<synchronous>, transform_indices = @transform_2, window_bounds = array<i64: 96, 1024>}, {pipeline_mode = #tpu.pipeline_mode<synchronous>, transform_indices = @transform_3, window_bounds = array<i64: 1, 1024>}, {pipeline_mode = #tpu.pipeline_mode<synchronous>, transform_indices = @transform_4, window_bounds = array<i64: 1, 1024>}, {pipeline_mode = #tpu.pipeline_mode<synchronous>, transform_indices = @transform_5, window_bounds = array<i64: 1024, 64>}, {pipeline_mode = #tpu.pipeline_mode<synchronous>, transform_indices = @transform_6, window_bounds = array<i64: 1, 64>}, {pipeline_mode = #tpu.pipeline_mode<synchronous>, transform_indices = @transform_7, window_bounds = array<i64: 64, 1>}, {pipeline_mode = #tpu.pipeline_mode<synchronous>, transform_indices = @transform_8, window_bounds = array<i64: 1, 1>}, {pipeline_mode = #tpu.pipeline_mode<synchronous>, transform_indices = @transform_9, window_bounds = array<i64: 2, 1>}]} {
    %c0 = arith.constant 0 : index
    %c0_0 = arith.constant 0 : index
    %0 = vector.load %arg1[%c0, %c0_0] : memref<2x96xf32, #tpu.memory_space<vmem>>, vector<2x96xf32>
    %c0_1 = arith.constant 0 : index
    %c0_2 = arith.constant 0 : index
    %1 = vector.load %arg2[%c0_1, %c0_2] : memref<96x512xf32, #tpu.memory_space<vmem>>, vector<96x512xf32>
    %cst = arith.constant dense<0.000000e+00> : vector<2x512xf32>
    %2 = tpu.matmul %0, %1, %cst {dimension_numbers = #tpu.dot_dimension_numbers<[1], [0], [0], [1], [0, 0, 1, 1], [], []>} : vector<2x96xf32>, vector<96x512xf32>, vector<2x512xf32> -> vector<2x512xf32>
    %cst_3 = arith.constant dense<0.000000e+00> : vector<512xf32>
    %3 = vector.multi_reduction <add>, %2, %cst_3 [0] : vector<2x512xf32> to vector<512xf32>
    %4 = vector.shape_cast %3 : vector<512xf32> to vector<1x512xf32>
    %cst_4 = arith.constant 2.000000e+00 : f32
    %5 = vector.broadcast %cst_4 : f32 to vector<1x512xf32>
    %6 = arith.divf %4, %5 : vector<1x512xf32>
    %7 = vector.broadcast %6 : vector<1x512xf32> to vector<2x512xf32>
    %8 = arith.subf %2, %7 : vector<2x512xf32>
    %9 = arith.mulf %8, %8 : vector<2x512xf32>
    %cst_5 = arith.constant dense<0.000000e+00> : vector<512xf32>
    %10 = vector.multi_reduction <add>, %9, %cst_5 [0] : vector<2x512xf32> to vector<512xf32>
    %11 = vector.shape_cast %10 : vector<512xf32> to vector<1x512xf32>
    %cst_6 = arith.constant 2.000000e+00 : f32
    %12 = vector.broadcast %cst_6 : f32 to vector<1x512xf32>
    %13 = arith.divf %11, %12 : vector<1x512xf32>
    %cst_7 = arith.constant 9.99999993E-9 : f32
    %14 = vector.broadcast %cst_7 : f32 to vector<1x512xf32>
    %15 = arith.addf %13, %14 : vector<1x512xf32>
    %16 = math.sqrt %15 : vector<1x512xf32>
    %17 = vector.shape_cast %16 : vector<1x512xf32> to vector<1x1x512xf32>
    %cst_8 = arith.constant dense<0.000000e+00> : vector<1xf32>
    %18 = vector.multi_reduction <add>, %17, %cst_8 [1, 2] : vector<1x1x512xf32> to vector<1xf32>
    %19 = vector.shape_cast %18 : vector<1xf32> to vector<1x1x1xf32>
    %20 = vector.extract %19[0, 0, 0] : f32 from vector<1x1x1xf32>
    %cst_9 = arith.constant 5.120000e+02 : f32
    %21 = arith.divf %20, %cst_9 : f32
    %c0_10 = arith.constant 0 : index
    %c0_11 = arith.constant 0 : index
    %22 = vector.load %arg3[%c0_10, %c0_11] : memref<96x1024xf32, #tpu.memory_space<vmem>>, vector<96x1024xf32>
    %cst_12 = arith.constant dense<0.000000e+00> : vector<2x1024xf32>
    %23 = tpu.matmul %0, %22, %cst_12 {dimension_numbers = #tpu.dot_dimension_numbers<[1], [0], [0], [1], [0, 0, 1, 1], [], []>} : vector<2x96xf32>, vector<96x1024xf32>, vector<2x1024xf32> -> vector<2x1024xf32>
    %c0_13 = arith.constant 0 : index
    %c0_14 = arith.constant 0 : index
    %24 = vector.load %arg4[%c0_13, %c0_14] : memref<1x1024xf32, #tpu.memory_space<vmem>>, vector<1x1024xf32>
    %25 = vector.broadcast %24 : vector<1x1024xf32> to vector<2x1024xf32>
    %26 = arith.addf %23, %25 : vector<2x1024xf32>
    %c0_15 = arith.constant 0 : index
    %c0_16 = arith.constant 0 : index
    %27 = vector.load %arg5[%c0_15, %c0_16] : memref<1x1024xf32, #tpu.memory_space<vmem>>, vector<1x1024xf32>
    %28 = vector.broadcast %21 : f32 to vector<1x1024xf32>
    %29 = arith.mulf %28, %27 : vector<1x1024xf32>
    %30 = vector.broadcast %29 : vector<1x1024xf32> to vector<2x1024xf32>
    %31 = arith.addf %26, %30 : vector<2x1024xf32>
    %cst_17 = arith.constant 0.000000e+00 : f32
    %32 = vector.broadcast %cst_17 : f32 to vector<2x1024xf32>
    %33 = arith.cmpf oge, %31, %32 : vector<2x1024xf32>
    %cst_18 = arith.constant 2.000000e-01 : f32
    %34 = vector.broadcast %cst_18 : f32 to vector<2x1024xf32>
    %35 = arith.mulf %34, %31 : vector<2x1024xf32>
    %36 = arith.select %33, %31, %35 : vector<2x1024xi1>, vector<2x1024xf32>
    %c0_19 = arith.constant 0 : index
    %c0_20 = arith.constant 0 : index
    %37 = vector.load %arg6[%c0_19, %c0_20] : memref<1024x64xf32, #tpu.memory_space<vmem>>, vector<1024x64xf32>
    %cst_21 = arith.constant dense<0.000000e+00> : vector<2x64xf32>
    %38 = tpu.matmul %36, %37, %cst_21 {dimension_numbers = #tpu.dot_dimension_numbers<[1], [0], [0], [1], [0, 0, 1, 1], [], []>} : vector<2x1024xf32>, vector<1024x64xf32>, vector<2x64xf32> -> vector<2x64xf32>
    %c0_22 = arith.constant 0 : index
    %c0_23 = arith.constant 0 : index
    %39 = vector.load %arg7[%c0_22, %c0_23] : memref<1x64xf32, #tpu.memory_space<vmem>>, vector<1x64xf32>
    %40 = vector.broadcast %39 : vector<1x64xf32> to vector<2x64xf32>
    %41 = arith.addf %38, %40 : vector<2x64xf32>
    %cst_24 = arith.constant 0.000000e+00 : f32
    %42 = vector.broadcast %cst_24 : f32 to vector<2x64xf32>
    %43 = arith.cmpf oge, %41, %42 : vector<2x64xf32>
    %cst_25 = arith.constant 2.000000e-01 : f32
    %44 = vector.broadcast %cst_25 : f32 to vector<2x64xf32>
    %45 = arith.mulf %44, %41 : vector<2x64xf32>
    %46 = arith.select %43, %41, %45 : vector<2x64xi1>, vector<2x64xf32>
    %c0_26 = arith.constant 0 : index
    %c0_27 = arith.constant 0 : index
    %47 = vector.load %arg8[%c0_26, %c0_27] : memref<64x1xf32, #tpu.memory_space<vmem>>, vector<64x1xf32>
    %cst_28 = arith.constant dense<0.000000e+00> : vector<2x1xf32>
    %48 = tpu.matmul %46, %47, %cst_28 {dimension_numbers = #tpu.dot_dimension_numbers<[1], [0], [0], [1], [0, 0, 1, 1], [], []>} : vector<2x64xf32>, vector<64x1xf32>, vector<2x1xf32> -> vector<2x1xf32>
    %c0_29 = arith.constant 0 : index
    %c0_30 = arith.constant 0 : index
    %49 = vector.load %arg9[%c0_29, %c0_30] : memref<1x1xf32, #tpu.memory_space<vmem>>, vector<1x1xf32>
    %50 = vector.broadcast %49 : vector<1x1xf32> to vector<2x1xf32>
    %51 = arith.addf %48, %50 : vector<2x1xf32>
    %c0_31 = arith.constant 0 : index
    %c0_32 = arith.constant 0 : index
    %52 = vector.load %arg10[%c0_31, %c0_32] : memref<2x1xf32, #tpu.memory_space<vmem>>, vector<2x1xf32>
    tpu.vector_store %arg10[%c0_31, %c0_32], %51 {strides = array<i32>} : memref<2x1xf32, #tpu.memory_space<vmem>>, vector<2x1xf32>,
    return
  }
  func.func @transform_0(%arg0: i32) -> (i32, i32) {
    %c0_i32 = arith.constant 0 : i32
    %c0_i32_0 = arith.constant 0 : i32
    %c0_i32_1 = arith.constant 0 : i32
    return %c0_i32, %c0_i32_0 : i32, i32
  }
  func.func @transform_1(%arg0: i32) -> (i32, i32) {
    %c0_i32 = arith.constant 0 : i32
    %c0_i32_0 = arith.constant 0 : i32
    %c0_i32_1 = arith.constant 0 : i32
    return %c0_i32, %c0_i32_0 : i32, i32
  }
  func.func @transform_2(%arg0: i32) -> (i32, i32) {
    %c0_i32 = arith.constant 0 : i32
    %c0_i32_0 = arith.constant 0 : i32
    %c0_i32_1 = arith.constant 0 : i32
    return %c0_i32, %c0_i32_0 : i32, i32
  }
  func.func @transform_3(%arg0: i32) -> (i32, i32) {
    %c0_i32 = arith.constant 0 : i32
    %c0_i32_0 = arith.constant 0 : i32
    %c0_i32_1 = arith.constant 0 : i32
    return %c0_i32, %c0_i32_0 : i32, i32
  }
  func.func @transform_4(%arg0: i32) -> (i32, i32) {
    %c0_i32 = arith.constant 0 : i32
    %c0_i32_0 = arith.constant 0 : i32
    %c0_i32_1 = arith.constant 0 : i32
    return %c0_i32, %c0_i32_0 : i32, i32
  }
  func.func @transform_5(%arg0: i32) -> (i32, i32) {
    %c0_i32 = arith.constant 0 : i32
    %c0_i32_0 = arith.constant 0 : i32
    %c0_i32_1 = arith.constant 0 : i32
    return %c0_i32, %c0_i32_0 : i32, i32
  }
  func.func @transform_6(%arg0: i32) -> (i32, i32) {
    %c0_i32 = arith.constant 0 : i32
    %c0_i32_0 = arith.constant 0 : i32
    %c0_i32_1 = arith.constant 0 : i32
    return %c0_i32, %c0_i32_0 : i32, i32
  }
  func.func @transform_7(%arg0: i32) -> (i32, i32) {
    %c0_i32 = arith.constant 0 : i32
    %c0_i32_0 = arith.constant 0 : i32
    %c0_i32_1 = arith.constant 0 : i32
    return %c0_i32, %c0_i32_0 : i32, i32
  }
  func.func @transform_8(%arg0: i32) -> (i32, i32) {
    %c0_i32 = arith.constant 0 : i32
    %c0_i32_0 = arith.constant 0 : i32
    %c0_i32_1 = arith.constant 0 : i32
    return %c0_i32, %c0_i32_0 : i32, i32
  }
  func.func @transform_9(%arg0: i32) -> (i32, i32) {
    %c0_i32 = arith.constant 0 : i32
    %c0_i32_0 = arith.constant 0 : i32
    %c0_i32_1 = arith.constant 0 : i32
    return %c0_i32, %c0_i32_0 : i32, i32
  }
}

</mosaic_0001>

<llo_original>
// kernel: nframes_discriminator_forward.1
$region0: #{nframes_discriminator_forward.1}
  #allocation0 [shape = 'u32[]', space=smem, size = 0x4, offset = 0x4, fixed_abs, tag = 'smem constant byte address 0x4 - core index']
  #allocation1 [shape = 'u32[144,128]{1,0:T(1,128)}', space=vmem, size = 0x12000, scoped, tag = 'internal scratch']
  #allocation2 [shape = 'f32[1,1]{1,0:T(1,128)S(1)}', space=vmem, size = 0x200, scoped, tag = 'scoped memory for nframes_discriminator_forward.1']
  %s0 = inlined_call_operand.vmem [shape: f32[2,96], index: 0, kind: input, shape index: {}]
  %s1 = inlined_call_operand.vmem [shape: f32[96,512], index: 1, kind: input, shape index: {}]
  %s2 = inlined_call_operand.vmem [shape: f32[96,1024], index: 2, kind: input, shape index: {}]
  %s3 = inlined_call_operand.vmem [shape: f32[1,1024], index: 3, kind: input, shape index: {}]
  %s4 = inlined_call_operand.vmem [shape: f32[1,1024], index: 4, kind: input, shape index: {}]
  %s5 = inlined_call_operand.vmem [shape: f32[1024,64], index: 5, kind: input, shape index: {}]
  %s6 = inlined_call_operand.vmem [shape: f32[1,64], index: 6, kind: input, shape index: {}]
  %s7 = inlined_call_operand.vmem [shape: f32[64,1], index: 7, kind: input, shape index: {}]
  %s8 = inlined_call_operand.<no memory space> [shape: f32[1,1], index: 8, kind: input, shape index: {}]
  %s9 = inlined_call_operand.vmem [shape: f32[2,1], index: 9, kind: output, shape index: {}]
  %s10 = sld [smem:[#allocation0]]
  $region46: #{nframes_discriminator_forward.1} parent=0
    _
  %s12 = ssub.s32 1, %s10
  %s13 = scalar_select 0, %s12, %s10
  %v14 = vstv %s8
  %15 = vst [vmem:[#allocation2] sm:$0x1] %v14
  // Predicated region
  $region2: #{nframes_discriminator_forward.1} parent=0 // pred_check
    _
  $region3: #{nframes_discriminator_forward.1} parent=0 // pred_check_branch
    %17 = sbr.rel (0) target = $region5
  $region4: #{nframes_discriminator_forward.1} parent=0 // pred_region
    _
  $region5: #{nframes_discriminator_forward.1} parent=0 // pred_fallthru
    _
  // Predicated region
  $region6: #{nframes_discriminator_forward.1} parent=0 // pred_check
    _
  $region7: #{nframes_discriminator_forward.1} parent=0 // pred_check_branch
    %19 = sbr.rel (0) target = $region9
  $region8: #{nframes_discriminator_forward.1} parent=0 // pred_region
    _
  $region9: #{nframes_discriminator_forward.1} parent=0 // pred_fallthru
    _
  // Predicated region
  $region10: #{nframes_discriminator_forward.1} parent=0 // pred_check
    _
  $region11: #{nframes_discriminator_forward.1} parent=0 // pred_check_branch
    %21 = sbr.rel (0) target = $region13
  $region12: #{nframes_discriminator_forward.1} parent=0 // pred_region
    _
  $region13: #{nframes_discriminator_forward.1} parent=0 // pred_fallthru
    _
  // Predicated region
  $region14: #{nframes_discriminator_forward.1} parent=0 // pred_check
    _
  $region15: #{nframes_discriminator_forward.1} parent=0 // pred_check_branch
    %23 = sbr.rel (0) target = $region17
  $region16: #{nframes_discriminator_forward.1} parent=0 // pred_region
    _
  $region17: #{nframes_discriminator_forward.1} parent=0 // pred_fallthru
    _
  // Predicated region
  $region18: #{nframes_discriminator_forward.1} parent=0 // pred_check
    _
  $region19: #{nframes_discriminator_forward.1} parent=0 // pred_check_branch
    %25 = sbr.rel (0) target = $region21
  $region20: #{nframes_discriminator_forward.1} parent=0 // pred_region
    _
  $region21: #{nframes_discriminator_forward.1} parent=0 // pred_fallthru
    _
  // Predicated region
  $region22: #{nframes_discriminator_forward.1} parent=0 // pred_check
    _
  $region23: #{nframes_discriminator_forward.1} parent=0 // pred_check_branch
    %27 = sbr.rel (0) target = $region25
  $region24: #{nframes_discriminator_forward.1} parent=0 // pred_region
    _
  $region25: #{nframes_discriminator_forward.1} parent=0 // pred_fallthru
    _
  // Predicated region
  $region26: #{nframes_discriminator_forward.1} parent=0 // pred_check
    _
  $region27: #{nframes_discriminator_forward.1} parent=0 // pred_check_branch
    %29 = sbr.rel (0) target = $region29
  $region28: #{nframes_discriminator_forward.1} parent=0 // pred_region
    _
  $region29: #{nframes_discriminator_forward.1} parent=0 // pred_fallthru
    _
  // Predicated region
  $region30: #{nframes_discriminator_forward.1} parent=0 // pred_check
    _
  $region31: #{nframes_discriminator_forward.1} parent=0 // pred_check_branch
    %31 = sbr.rel (0) target = $region33
  $region32: #{nframes_discriminator_forward.1} parent=0 // pred_region
    _
  $region33: #{nframes_discriminator_forward.1} parent=0 // pred_fallthru
    _
  // Predicated region
  $region34: #{nframes_discriminator_forward.1} parent=0 // pred_check
    _
  $region35: #{nframes_discriminator_forward.1} parent=0 // pred_check_branch
    %33 = sbr.rel (0) target = $region37
  $region36: #{nframes_discriminator_forward.1} parent=0 // pred_region
    _
  $region37: #{nframes_discriminator_forward.1} parent=0 // pred_fallthru
    _
  %v34 = vld [vmem:[%s0] sm:$0x3]
  %v35 = vld [vmem:[%s1] sm:$0xff]
  %v36 = vld [vmem:[%s1 + $0x8] sm:$0xff]
  %v37 = vld [vmem:[%s1 + $0x10] sm:$0xff]
  %v38 = vld [vmem:[%s1 + $0x18] sm:$0xff]
  %v39 = vld [vmem:[%s1 + $0x20] sm:$0xff]
  %v40 = vld [vmem:[%s1 + $0x28] sm:$0xff]
  %v41 = vld [vmem:[%s1 + $0x30] sm:$0xff]
  %v42 = vld [vmem:[%s1 + $0x38] sm:$0xff]
  %v43 = vld [vmem:[%s1 + $0x40] sm:$0xff]
  %v44 = vld [vmem:[%s1 + $0x48] sm:$0xff]
  %v45 = vld [vmem:[%s1 + $0x50] sm:$0xff]
  %v46 = vld [vmem:[%s1 + $0x58] sm:$0xff]
  %v47 = vld [vmem:[%s1 + $0x60] sm:$0xff]
  %v48 = vld [vmem:[%s1 + $0x68] sm:$0xff]
  %v49 = vld [vmem:[%s1 + $0x70] sm:$0xff]
  %v50 = vld [vmem:[%s1 + $0x78] sm:$0xff]
  %v51 = vld [vmem:[%s1 + $0x80] sm:$0xff]
  %v52 = vld [vmem:[%s1 + $0x88] sm:$0xff]
  %v53 = vld [vmem:[%s1 + $0x90] sm:$0xff]
  %v54 = vld [vmem:[%s1 + $0x98] sm:$0xff]
  %v55 = vld [vmem:[%s1 + $0xa0] sm:$0xff]
  %v56 = vld [vmem:[%s1 + $0xa8] sm:$0xff]
  %v57 = vld [vmem:[%s1 + $0xb0] sm:$0xff]
  %v58 = vld [vmem:[%s1 + $0xb8] sm:$0xff]
  %v59 = vld [vmem:[%s1 + $0xc0] sm:$0xff]
  %v60 = vld [vmem:[%s1 + $0xc8] sm:$0xff]
  %v61 = vld [vmem:[%s1 + $0xd0] sm:$0xff]
  %v62 = vld [vmem:[%s1 + $0xd8] sm:$0xff]
  %v63 = vld [vmem:[%s1 + $0xe0] sm:$0xff]
  %v64 = vld [vmem:[%s1 + $0xe8] sm:$0xff]
  %v65 = vld [vmem:[%s1 + $0xf0] sm:$0xff]
  %v66 = vld [vmem:[%s1 + $0xf8] sm:$0xff]
  %v67 = vld [vmem:[%s1 + $0x100] sm:$0xff]
  %v68 = vld [vmem:[%s1 + $0x108] sm:$0xff]
  %v69 = vld [vmem:[%s1 + $0x110] sm:$0xff]
  %v70 = vld [vmem:[%s1 + $0x118] sm:$0xff]
  %v71 = vld [vmem:[%s1 + $0x120] sm:$0xff]
  %v72 = vld [vmem:[%s1 + $0x128] sm:$0xff]
  %v73 = vld [vmem:[%s1 + $0x130] sm:$0xff]
  %v74 = vld [vmem:[%s1 + $0x138] sm:$0xff]
  %v75 = vld [vmem:[%s1 + $0x140] sm:$0xff]
  %v76 = vld [vmem:[%s1 + $0x148] sm:$0xff]
  %v77 = vld [vmem:[%s1 + $0x150] sm:$0xff]
  %v78 = vld [vmem:[%s1 + $0x158] sm:$0xff]
  %v79 = vld [vmem:[%s1 + $0x160] sm:$0xff]
  %v80 = vld [vmem:[%s1 + $0x168] sm:$0xff]
  %v81 = vld [vmem:[%s1 + $0x170] sm:$0xff]
  %v82 = vld [vmem:[%s1 + $0x178] sm:$0xff]
  %vm83 = vcmask 785408
  %v85 = vsel %vm83, %v34, 0
  %87 = vmatprep.subr.mxu0 %v36
  %88 = vmatpush1.msra.mxu0 %v35
  %89 = vmatprep.subr.mxu0 %v40
  %90 = vmatpush1.msra.mxu0 %v39
  %91 = vmatprep.subr.mxu0 %v44
  %92 = vmatpush1.msra.mxu0 %v43
  %93 = vmatprep.subr.mxu0 %v48
  %94 = vmatpush1.msra.mxu0 %v47
  %95 = vmatprep.subr.mxu0 %v52
  %96 = vmatpush1.msra.mxu0 %v51
  %97 = vmatprep.subr.mxu0 %v56
  %98 = vmatpush1.msra.mxu0 %v55
  %99 = vmatprep.subr.mxu0 %v60
  %100 = vmatpush1.msra.mxu0 %v59
  %101 = vmatprep.subr.mxu0 %v64
  %102 = vmatpush1.msra.mxu0 %v63
  %103 = vmatprep.subr.mxu0 %v68
  %104 = vmatpush1.msra.mxu0 %v67
  %105 = vmatprep.subr.mxu0 %v72
  %106 = vmatpush1.msra.mxu0 %v71
  %107 = vmatprep.subr.mxu0 %v76
  %108 = vmatpush1.msra.mxu0 %v75
  %109 = vmatprep.subr.mxu0 %v80
  %110 = vmatpush1.msra.mxu0 %v79
  %111 = vmatprep.subr.mxu0 0.0
  %112 = vmatpush1.msra.mxu0 0.0
  %113 = vmatprep.subr.mxu0 0.0
  %114 = vmatpush1.msra.mxu0 0.0
  %115 = vmatprep.subr.mxu0 0.0
  %116 = vmatpush1.msra.mxu0 0.0
  %117 = vmatprep.subr.mxu0 0.0
  %118 = vmatpush1.msra.mxu0 0.0
  %119 = vmatprep.subr.mxu0 0.0
  %120 = vmatpush1.msra.mxu0 0.0
  %121 = vmatprep.subr.mxu0 0.0
  %122 = vmatpush1.msra.mxu0 0.0
  %123 = vmatprep.subr.mxu0 0.0
  %124 = vmatpush1.msra.mxu0 0.0
  %125 = vmatprep.subr.mxu0 0.0
  %126 = vmatpush1.msra.mxu0 0.0
  %127 = vmatprep.subr.mxu0 0.0
  %128 = vmatpush1.msra.mxu0 0.0
  %129 = vmatprep.subr.mxu0 0.0
  %130 = vmatpush1.msra.mxu0 0.0
  %131 = vmatprep.subr.mxu0 0.0
  %132 = vmatpush1.msra.mxu0 0.0
  %133 = vmatprep.subr.mxu0 0.0
  %134 = vmatpush1.msra.mxu0 0.0
  %135 = vmatprep.subr.mxu0 0.0
  %136 = vmatpush1.msra.mxu0 0.0
  %137 = vmatprep.subr.mxu0 0.0
  %138 = vmatpush1.msra.mxu0 0.0
  %139 = vmatprep.subr.mxu0 0.0
  %140 = vmatpush1.msra.mxu0 0.0
  %141 = vmatprep.subr.mxu0 0.0
  %142 = vmatpush1.msra.mxu0 0.0
  %143 = vmatprep.subr.mxu0 0.0
  %144 = vmatpush1.msra.mxu0 0.0
  %145 = vmatprep.subr.mxu0 0.0
  %146 = vmatpush1.msra.mxu0 0.0
  %147 = vmatprep.subr.mxu0 0.0
  %148 = vmatpush1.msra.mxu0 0.0
  %149 = vmatprep.subr.mxu0 0.0
  %150 = vmatpush1.msra.mxu0 0.0
  %151 = vmatprep.mubr.f32.mxu0 0.0
  %152 = vmatmul.mubr.f32.gmra.mrb[0].mxu0 %v85
  %v153 = vpop.f32.mrb[0].mxu0
  %v154 = vadd.f32 0.0, %v153
  %v155 = vpop.f32.mrb[0].mxu0
  %v156 = vadd.f32 0.0, %v155
  %157 = vdwg.mxu0
  %158 = vmatprep.subr.mxu0 %v38
  %159 = vmatpush1.msra.mxu0 %v37
  %160 = vmatprep.subr.mxu0 %v42
  %161 = vmatpush1.msra.mxu0 %v41
  %162 = vmatprep.subr.mxu0 %v46
  %163 = vmatpush1.msra.mxu0 %v45
  %164 = vmatprep.subr.mxu0 %v50
  %165 = vmatpush1.msra.mxu0 %v49
  %166 = vmatprep.subr.mxu0 %v54
  %167 = vmatpush1.msra.mxu0 %v53
  %168 = vmatprep.subr.mxu0 %v58
  %169 = vmatpush1.msra.mxu0 %v57
  %170 = vmatprep.subr.mxu0 %v62
  %171 = vmatpush1.msra.mxu0 %v61
  %172 = vmatprep.subr.mxu0 %v66
  %173 = vmatpush1.msra.mxu0 %v65
  %174 = vmatprep.subr.mxu0 %v70
  %175 = vmatpush1.msra.mxu0 %v69
  %176 = vmatprep.subr.mxu0 %v74
  %177 = vmatpush1.msra.mxu0 %v73
  %178 = vmatprep.subr.mxu0 %v78
  %179 = vmatpush1.msra.mxu0 %v77
  %180 = vmatprep.subr.mxu0 %v82
  %181 = vmatpush1.msra.mxu0 %v81
  %182 = vmatprep.subr.mxu0 0.0
  %183 = vmatpush1.msra.mxu0 0.0
  %184 = vmatprep.subr.mxu0 0.0
  %185 = vmatpush1.msra.mxu0 0.0
  %186 = vmatprep.subr.mxu0 0.0
  %187 = vmatpush1.msra.mxu0 0.0
  %188 = vmatprep.subr.mxu0 0.0
  %189 = vmatpush1.msra.mxu0 0.0
  %190 = vmatprep.subr.mxu0 0.0
  %191 = vmatpush1.msra.mxu0 0.0
  %192 = vmatprep.subr.mxu0 0.0
  %193 = vmatpush1.msra.mxu0 0.0
  %194 = vmatprep.subr.mxu0 0.0
  %195 = vmatpush1.msra.mxu0 0.0
  %196 = vmatprep.subr.mxu0 0.0
  %197 = vmatpush1.msra.mxu0 0.0
  %198 = vmatprep.subr.mxu0 0.0
  %199 = vmatpush1.msra.mxu0 0.0
  %200 = vmatprep.subr.mxu0 0.0
  %201 = vmatpush1.msra.mxu0 0.0
  %202 = vmatprep.subr.mxu0 0.0
  %203 = vmatpush1.msra.mxu0 0.0
  %204 = vmatprep.subr.mxu0 0.0
  %205 = vmatpush1.msra.mxu0 0.0
  %206 = vmatprep.subr.mxu0 0.0
  %207 = vmatpush1.msra.mxu0 0.0
  %208 = vmatprep.subr.mxu0 0.0
  %209 = vmatpush1.msra.mxu0 0.0
  %210 = vmatprep.subr.mxu0 0.0
  %211 = vmatpush1.msra.mxu0 0.0
  %212 = vmatprep.subr.mxu0 0.0
  %213 = vmatpush1.msra.mxu0 0.0
  %214 = vmatprep.subr.mxu0 0.0
  %215 = vmatpush1.msra.mxu0 0.0
  %216 = vmatprep.subr.mxu0 0.0
  %217 = vmatpush1.msra.mxu0 0.0
  %218 = vmatprep.subr.mxu0 0.0
  %219 = vmatpush1.msra.mxu0 0.0
  %220 = vmatprep.subr.mxu0 0.0
  %221 = vmatpush1.msra.mxu0 0.0
  %222 = vmatprep.mubr.f32.mxu0 0.0
  %223 = vmatmul.mubr.f32.gmra.mrb[0].mxu0 %v85
  %v224 = vpop.f32.mrb[0].mxu0
  %v225 = vadd.f32 0.0, %v224
  %v226 = vpop.f32.mrb[0].mxu0
  %v227 = vadd.f32 0.0, %v226
  %228 = vdwg.mxu0
  %vm229 = vcmask 1041408
  %v230 = vsel %vm229, %v154, 0.0
  %v231 = vrot.slane %v230, 4
  %v232 = vadd.f32 %v230, %v231
  %v233 = vrot.slane %v232, 2
  %v234 = vadd.f32 %v232, %v233
  %v235 = vrot.slane %v234, 1
  %v236 = vadd.f32 %v234, %v235
  %v237 = vsel %vm229, %v156, 0.0
  %v238 = vrot.slane %v237, 4
  %v239 = vadd.f32 %v237, %v238
  %v240 = vrot.slane %v239, 2
  %v241 = vadd.f32 %v239, %v240
  %v242 = vrot.slane %v241, 1
  %v243 = vadd.f32 %v241, %v242
  %v244 = vsel %vm229, %v225, 0.0
  %v245 = vrot.slane %v244, 4
  %v246 = vadd.f32 %v244, %v245
  %v247 = vrot.slane %v246, 2
  %v248 = vadd.f32 %v246, %v247
  %v249 = vrot.slane %v248, 1
  %v250 = vadd.f32 %v248, %v249
  %v251 = vsel %vm229, %v227, 0.0
  %v252 = vrot.slane %v251, 4
  %v253 = vadd.f32 %v251, %v252
  %v254 = vrot.slane %v253, 2
  %v255 = vadd.f32 %v253, %v254
  %v256 = vrot.slane %v255, 1
  %v257 = vadd.f32 %v255, %v256
  %v258 = vrcp.pop 2.0
  %v259 = vmul.f32 %v236, %v258
  %v260 = vmul.f32 %v243, %v258
  %v261 = vmul.f32 %v250, %v258
  %v262 = vmul.f32 %v257, %v258
  %v263 = vsub.f32 %v154, %v259
  %v264 = vsub.f32 %v156, %v260
  %v265 = vsub.f32 %v225, %v261
  %v266 = vsub.f32 %v227, %v262
  %v267 = vmul.f32 %v263, %v263
  %v268 = vmul.f32 %v264, %v264
  %v269 = vmul.f32 %v265, %v265
  %v270 = vmul.f32 %v266, %v266
  %v271 = vsel %vm229, %v267, 0.0
  %v272 = vrot.slane %v271, 4
  %v273 = vadd.f32 %v271, %v272
  %v274 = vrot.slane %v273, 2
  %v275 = vadd.f32 %v273, %v274
  %v276 = vrot.slane %v275, 1
  %v277 = vadd.f32 %v275, %v276
  %v278 = vsel %vm229, %v268, 0.0
  %v279 = vrot.slane %v278, 4
  %v280 = vadd.f32 %v278, %v279
  %v281 = vrot.slane %v280, 2
  %v282 = vadd.f32 %v280, %v281
  %v283 = vrot.slane %v282, 1
  %v284 = vadd.f32 %v282, %v283
  %v285 = vsel %vm229, %v269, 0.0
  %v286 = vrot.slane %v285, 4
  %v287 = vadd.f32 %v285, %v286
  %v288 = vrot.slane %v287, 2
  %v289 = vadd.f32 %v287, %v288
  %v290 = vrot.slane %v289, 1
  %v291 = vadd.f32 %v289, %v290
  %v292 = vsel %vm229, %v270, 0.0
  %v293 = vrot.slane %v292, 4
  %v294 = vadd.f32 %v292, %v293
  %v295 = vrot.slane %v294, 2
  %v296 = vadd.f32 %v294, %v295
  %v297 = vrot.slane %v296, 1
  %v298 = vadd.f32 %v296, %v297
  %v299 = vmul.f32 %v277, %v258
  %v300 = vmul.f32 %v284, %v258
  %v301 = vmul.f32 %v291, %v258
  %v302 = vmul.f32 %v298, %v258
  %v303 = vadd.f32 %v299, 1e-08
  %v304 = vadd.f32 %v300, 1e-08
  %v305 = vadd.f32 %v301, 1e-08
  %v306 = vadd.f32 %v302, 1e-08
  %v307 = vrsqrt.pop %v303
  %v308 = vmul.f32 %v303, %v307
  %vm309 = vcmp.eq.f32.partialorder %v303, inf
  %v310 = vsel %vm309, %v303, %v308
  %vm311 = vcmp.eq.f32.partialorder %v303, 0.0
  %v312 = vand.u32 %v303, 2147483648
  %v313 = vsel %vm311, %v312, %v310
  %v314 = vrsqrt.pop %v304
  %v315 = vmul.f32 %v304, %v314
  %vm316 = vcmp.eq.f32.partialorder %v304, inf
  %v317 = vsel %vm316, %v304, %v315
  %vm318 = vcmp.eq.f32.partialorder %v304, 0.0
  %v319 = vand.u32 %v304, 2147483648
  %v320 = vsel %vm318, %v319, %v317
  %v321 = vrsqrt.pop %v305
  %v322 = vmul.f32 %v305, %v321
  %vm323 = vcmp.eq.f32.partialorder %v305, inf
  %v324 = vsel %vm323, %v305, %v322
  %vm325 = vcmp.eq.f32.partialorder %v305, 0.0
  %v326 = vand.u32 %v305, 2147483648
  %v327 = vsel %vm325, %v326, %v324
  %v328 = vrsqrt.pop %v306
  %v329 = vmul.f32 %v306, %v328
  %vm330 = vcmp.eq.f32.partialorder %v306, inf
  %v331 = vsel %vm330, %v306, %v329
  %vm332 = vcmp.eq.f32.partialorder %v306, 0.0
  %v333 = vand.u32 %v306, 2147483648
  %v334 = vsel %vm332, %v333, %v331
  %vm335 = vcmask 1040384
  %v336 = vsel %vm335, %v313, 0.0
  %v337 = vsel %vm335, %v320, 0.0
  %v338 = vadd.f32 %v336, %v337
  %v339 = vsel %vm335, %v327, 0.0
  %v340 = vadd.f32 %v338, %v339
  %v341 = vsel %vm335, %v334, 0.0
  %v342 = vadd.f32 %v340, %v341
  %343 = vadd.xlane.f32.xlu0 %v342
  %v344 = vpop.xlane.xlu0 %343
  %v345 = vrot.slane %v344, 4
  %v346 = vadd.f32 %v344, %v345
  %v347 = vrot.slane %v346, 2
  %v348 = vadd.f32 %v346, %v347
  %v349 = vrot.slane %v348, 1
  %v350 = vadd.f32 %v348, %v349
  %s351 = vtos %v350
  %v352 = vrcp.pop 512.0
  %s353 = vtos %v352
  %s354 = smul.f32 %s351, %s353
  %v355 = vld [vmem:[%s2] sm:$0xff]
  %v356 = vld [vmem:[%s2 + $0x8] sm:$0xff]
  %v357 = vld [vmem:[%s2 + $0x10] sm:$0xff]
  %v358 = vld [vmem:[%s2 + $0x18] sm:$0xff]
  %v359 = vld [vmem:[%s2 + $0x20] sm:$0xff]
  %v360 = vld [vmem:[%s2 + $0x28] sm:$0xff]
  %v361 = vld [vmem:[%s2 + $0x30] sm:$0xff]
  %v362 = vld [vmem:[%s2 + $0x38] sm:$0xff]
  %v363 = vld [vmem:[%s2 + $0x40] sm:$0xff]
  %v364 = vld [vmem:[%s2 + $0x48] sm:$0xff]
  %v365 = vld [vmem:[%s2 + $0x50] sm:$0xff]
  %v366 = vld [vmem:[%s2 + $0x58] sm:$0xff]
  %v367 = vld [vmem:[%s2 + $0x60] sm:$0xff]
  %v368 = vld [vmem:[%s2 + $0x68] sm:$0xff]
  %v369 = vld [vmem:[%s2 + $0x70] sm:$0xff]
  %v370 = vld [vmem:[%s2 + $0x78] sm:$0xff]
  %v371 = vld [vmem:[%s2 + $0x80] sm:$0xff]
  %v372 = vld [vmem:[%s2 + $0x88] sm:$0xff]
  %v373 = vld [vmem:[%s2 + $0x90] sm:$0xff]
  %v374 = vld [vmem:[%s2 + $0x98] sm:$0xff]
  %v375 = vld [vmem:[%s2 + $0xa0] sm:$0xff]
  %v376 = vld [vmem:[%s2 + $0xa8] sm:$0xff]
  %v377 = vld [vmem:[%s2 + $0xb0] sm:$0xff]
  %v378 = vld [vmem:[%s2 + $0xb8] sm:$0xff]
  %v379 = vld [vmem:[%s2 + $0xc0] sm:$0xff]
  %v380 = vld [vmem:[%s2 + $0xc8] sm:$0xff]
  %v381 = vld [vmem:[%s2 + $0xd0] sm:$0xff]
  %v382 = vld [vmem:[%s2 + $0xd8] sm:$0xff]
  %v383 = vld [vmem:[%s2 + $0xe0] sm:$0xff]
  %v384 = vld [vmem:[%s2 + $0xe8] sm:$0xff]
  %v385 = vld [vmem:[%s2 + $0xf0] sm:$0xff]
  %v386 = vld [vmem:[%s2 + $0xf8] sm:$0xff]
  %v387 = vld [vmem:[%s2 + $0x100] sm:$0xff]
  %v388 = vld [vmem:[%s2 + $0x108] sm:$0xff]
  %v389 = vld [vmem:[%s2 + $0x110] sm:$0xff]
  %v390 = vld [vmem:[%s2 + $0x118] sm:$0xff]
  %v391 = vld [vmem:[%s2 + $0x120] sm:$0xff]
  %v392 = vld [vmem:[%s2 + $0x128] sm:$0xff]
  %v393 = vld [vmem:[%s2 + $0x130] sm:$0xff]
  %v394 = vld [vmem:[%s2 + $0x138] sm:$0xff]
  %v395 = vld [vmem:[%s2 + $0x140] sm:$0xff]
  %v396 = vld [vmem:[%s2 + $0x148] sm:$0xff]
  %v397 = vld [vmem:[%s2 + $0x150] sm:$0xff]
  %v398 = vld [vmem:[%s2 + $0x158] sm:$0xff]
  %v399 = vld [vmem:[%s2 + $0x160] sm:$0xff]
  %v400 = vld [vmem:[%s2 + $0x168] sm:$0xff]
  %v401 = vld [vmem:[%s2 + $0x170] sm:$0xff]
  %v402 = vld [vmem:[%s2 + $0x178] sm:$0xff]
  %v403 = vld [vmem:[%s2 + $0x180] sm:$0xff]
  %v404 = vld [vmem:[%s2 + $0x188] sm:$0xff]
  %v405 = vld [vmem:[%s2 + $0x190] sm:$0xff]
  %v406 = vld [vmem:[%s2 + $0x198] sm:$0xff]
  %v407 = vld [vmem:[%s2 + $0x1a0] sm:$0xff]
  %v408 = vld [vmem:[%s2 + $0x1a8] sm:$0xff]
  %v409 = vld [vmem:[%s2 + $0x1b0] sm:$0xff]
  %v410 = vld [vmem:[%s2 + $0x1b8] sm:$0xff]
  %v411 = vld [vmem:[%s2 + $0x1c0] sm:$0xff]
  %v412 = vld [vmem:[%s2 + $0x1c8] sm:$0xff]
  %v413 = vld [vmem:[%s2 + $0x1d0] sm:$0xff]
  %v414 = vld [vmem:[%s2 + $0x1d8] sm:$0xff]
  %v415 = vld [vmem:[%s2 + $0x1e0] sm:$0xff]
  %v416 = vld [vmem:[%s2 + $0x1e8] sm:$0xff]
  %v417 = vld [vmem:[%s2 + $0x1f0] sm:$0xff]
  %v418 = vld [vmem:[%s2 + $0x1f8] sm:$0xff]
  %v419 = vld [vmem:[%s2 + $0x200] sm:$0xff]
  %v420 = vld [vmem:[%s2 + $0x208] sm:$0xff]
  %v421 = vld [vmem:[%s2 + $0x210] sm:$0xff]
  %v422 = vld [vmem:[%s2 + $0x218] sm:$0xff]
  %v423 = vld [vmem:[%s2 + $0x220] sm:$0xff]
  %v424 = vld [vmem:[%s2 + $0x228] sm:$0xff]
  %v425 = vld [vmem:[%s2 + $0x230] sm:$0xff]
  %v426 = vld [vmem:[%s2 + $0x238] sm:$0xff]
  %v427 = vld [vmem:[%s2 + $0x240] sm:$0xff]
  %v428 = vld [vmem:[%s2 + $0x248] sm:$0xff]
  %v429 = vld [vmem:[%s2 + $0x250] sm:$0xff]
  %v430 = vld [vmem:[%s2 + $0x258] sm:$0xff]
  %v431 = vld [vmem:[%s2 + $0x260] sm:$0xff]
  %v432 = vld [vmem:[%s2 + $0x268] sm:$0xff]
  %v433 = vld [vmem:[%s2 + $0x270] sm:$0xff]
  %v434 = vld [vmem:[%s2 + $0x278] sm:$0xff]
  %v435 = vld [vmem:[%s2 + $0x280] sm:$0xff]
  %v436 = vld [vmem:[%s2 + $0x288] sm:$0xff]
  %v437 = vld [vmem:[%s2 + $0x290] sm:$0xff]
  %v438 = vld [vmem:[%s2 + $0x298] sm:$0xff]
  %v439 = vld [vmem:[%s2 + $0x2a0] sm:$0xff]
  %v440 = vld [vmem:[%s2 + $0x2a8] sm:$0xff]
  %v441 = vld [vmem:[%s2 + $0x2b0] sm:$0xff]
  %v442 = vld [vmem:[%s2 + $0x2b8] sm:$0xff]
  %v443 = vld [vmem:[%s2 + $0x2c0] sm:$0xff]
  %v444 = vld [vmem:[%s2 + $0x2c8] sm:$0xff]
  %v445 = vld [vmem:[%s2 + $0x2d0] sm:$0xff]
  %v446 = vld [vmem:[%s2 + $0x2d8] sm:$0xff]
  %v447 = vld [vmem:[%s2 + $0x2e0] sm:$0xff]
  %v448 = vld [vmem:[%s2 + $0x2e8] sm:$0xff]
  %v449 = vld [vmem:[%s2 + $0x2f0] sm:$0xff]
  %v450 = vld [vmem:[%s2 + $0x2f8] sm:$0xff]
  %v451 = vld [vmem:[%s3] sm:$0xff]
  %v453 = vlaneseq
  %v454 = vshrl.u32 %v453, 7
  %v455 = vsub.s32 0, %v454
  %v456 = vrot.slane %v451, %v455
  %v457 = vlaneseq
  %v458 = vshrl.u32 %v457, 7
  %v459 = vsub.s32 1, %v458
  %v460 = vrot.slane %v451, %v459
  %v461 = vlaneseq
  %v462 = vshrl.u32 %v461, 7
  %v463 = vsub.s32 2, %v462
  %v464 = vrot.slane %v451, %v463
  %v465 = vlaneseq
  %v466 = vshrl.u32 %v465, 7
  %v467 = vsub.s32 3, %v466
  %v468 = vrot.slane %v451, %v467
  %v469 = vlaneseq
  %v470 = vshrl.u32 %v469, 7
  %v471 = vsub.s32 4, %v470
  %v472 = vrot.slane %v451, %v471
  %v473 = vlaneseq
  %v474 = vshrl.u32 %v473, 7
  %v475 = vsub.s32 5, %v474
  %v476 = vrot.slane %v451, %v475
  %v477 = vlaneseq
  %v478 = vshrl.u32 %v477, 7
  %v479 = vsub.s32 6, %v478
  %v480 = vrot.slane %v451, %v479
  %v481 = vlaneseq
  %v482 = vshrl.u32 %v481, 7
  %v483 = vsub.s32 7, %v482
  %v484 = vrot.slane %v451, %v483
  %493 = vmatprep.subr.mxu0 %v356
  %494 = vmatpush1.msra.mxu0 %v355
  %495 = vmatprep.subr.mxu0 %v364
  %496 = vmatpush1.msra.mxu0 %v363
  %497 = vmatprep.subr.mxu0 %v372
  %498 = vmatpush1.msra.mxu0 %v371
  %499 = vmatprep.subr.mxu0 %v380
  %500 = vmatpush1.msra.mxu0 %v379
  %501 = vmatprep.subr.mxu0 %v388
  %502 = vmatpush1.msra.mxu0 %v387
  %503 = vmatprep.subr.mxu0 %v396
  %504 = vmatpush1.msra.mxu0 %v395
  %505 = vmatprep.subr.mxu0 %v404
  %506 = vmatpush1.msra.mxu0 %v403
  %507 = vmatprep.subr.mxu0 %v412
  %508 = vmatpush1.msra.mxu0 %v411
  %509 = vmatprep.subr.mxu0 %v420
  %510 = vmatpush1.msra.mxu0 %v419
  %511 = vmatprep.subr.mxu0 %v428
  %512 = vmatpush1.msra.mxu0 %v427
  %513 = vmatprep.subr.mxu0 %v436
  %514 = vmatpush1.msra.mxu0 %v435
  %515 = vmatprep.subr.mxu0 %v444
  %516 = vmatpush1.msra.mxu0 %v443
  %517 = vmatprep.subr.mxu0 0.0
  %518 = vmatpush1.msra.mxu0 0.0
  %519 = vmatprep.subr.mxu0 0.0
  %520 = vmatpush1.msra.mxu0 0.0
  %521 = vmatprep.subr.mxu0 0.0
  %522 = vmatpush1.msra.mxu0 0.0
  %523 = vmatprep.subr.mxu0 0.0
  %524 = vmatpush1.msra.mxu0 0.0
  %525 = vmatprep.subr.mxu0 0.0
  %526 = vmatpush1.msra.mxu0 0.0
  %527 = vmatprep.subr.mxu0 0.0
  %528 = vmatpush1.msra.mxu0 0.0
  %529 = vmatprep.subr.mxu0 0.0
  %530 = vmatpush1.msra.mxu0 0.0
  %531 = vmatprep.subr.mxu0 0.0
  %532 = vmatpush1.msra.mxu0 0.0
  %533 = vmatprep.subr.mxu0 0.0
  %534 = vmatpush1.msra.mxu0 0.0
  %535 = vmatprep.subr.mxu0 0.0
  %536 = vmatpush1.msra.mxu0 0.0
  %537 = vmatprep.subr.mxu0 0.0
  %538 = vmatpush1.msra.mxu0 0.0
  %539 = vmatprep.subr.mxu0 0.0
  %540 = vmatpush1.msra.mxu0 0.0
  %541 = vmatprep.subr.mxu0 0.0
  %542 = vmatpush1.msra.mxu0 0.0
  %543 = vmatprep.subr.mxu0 0.0
  %544 = vmatpush1.msra.mxu0 0.0
  %545 = vmatprep.subr.mxu0 0.0
  %546 = vmatpush1.msra.mxu0 0.0
  %547 = vmatprep.subr.mxu0 0.0
  %548 = vmatpush1.msra.mxu0 0.0
  %549 = vmatprep.subr.mxu0 0.0
  %550 = vmatpush1.msra.mxu0 0.0
  %551 = vmatprep.subr.mxu0 0.0
  %552 = vmatpush1.msra.mxu0 0.0
  %553 = vmatprep.subr.mxu0 0.0
  %554 = vmatpush1.msra.mxu0 0.0
  %555 = vmatprep.subr.mxu0 0.0
  %556 = vmatpush1.msra.mxu0 0.0
  %557 = vmatprep.mubr.f32.mxu0 0.0
  %558 = vmatmul.mubr.f32.gmra.mrb[0].mxu0 %v85
  %v559 = vpop.f32.mrb[0].mxu0
  %v560 = vadd.f32 %v456, %v559
  %v561 = vpop.f32.mrb[0].mxu0
  %v562 = vadd.f32 %v460, %v561
  %563 = vdwg.mxu0
  %564 = vmatprep.subr.mxu0 %v358
  %565 = vmatpush1.msra.mxu0 %v357
  %566 = vmatprep.subr.mxu0 %v366
  %567 = vmatpush1.msra.mxu0 %v365
  %568 = vmatprep.subr.mxu0 %v374
  %569 = vmatpush1.msra.mxu0 %v373
  %570 = vmatprep.subr.mxu0 %v382
  %571 = vmatpush1.msra.mxu0 %v381
  %572 = vmatprep.subr.mxu0 %v390
  %573 = vmatpush1.msra.mxu0 %v389
  %574 = vmatprep.subr.mxu0 %v398
  %575 = vmatpush1.msra.mxu0 %v397
  %576 = vmatprep.subr.mxu0 %v406
  %577 = vmatpush1.msra.mxu0 %v405
  %578 = vmatprep.subr.mxu0 %v414
  %579 = vmatpush1.msra.mxu0 %v413
  %580 = vmatprep.subr.mxu0 %v422
  %581 = vmatpush1.msra.mxu0 %v421
  %582 = vmatprep.subr.mxu0 %v430
  %583 = vmatpush1.msra.mxu0 %v429
  %584 = vmatprep.subr.mxu0 %v438
  %585 = vmatpush1.msra.mxu0 %v437
  %586 = vmatprep.subr.mxu0 %v446
  %587 = vmatpush1.msra.mxu0 %v445
  %588 = vmatprep.subr.mxu0 0.0
  %589 = vmatpush1.msra.mxu0 0.0
  %590 = vmatprep.subr.mxu0 0.0
  %591 = vmatpush1.msra.mxu0 0.0
  %592 = vmatprep.subr.mxu0 0.0
  %593 = vmatpush1.msra.mxu0 0.0
  %594 = vmatprep.subr.mxu0 0.0
  %595 = vmatpush1.msra.mxu0 0.0
  %596 = vmatprep.subr.mxu0 0.0
  %597 = vmatpush1.msra.mxu0 0.0
  %598 = vmatprep.subr.mxu0 0.0
  %599 = vmatpush1.msra.mxu0 0.0
  %600 = vmatprep.subr.mxu0 0.0
  %601 = vmatpush1.msra.mxu0 0.0
  %602 = vmatprep.subr.mxu0 0.0
  %603 = vmatpush1.msra.mxu0 0.0
  %604 = vmatprep.subr.mxu0 0.0
  %605 = vmatpush1.msra.mxu0 0.0
  %606 = vmatprep.subr.mxu0 0.0
  %607 = vmatpush1.msra.mxu0 0.0
  %608 = vmatprep.subr.mxu0 0.0
  %609 = vmatpush1.msra.mxu0 0.0
  %610 = vmatprep.subr.mxu0 0.0
  %611 = vmatpush1.msra.mxu0 0.0
  %612 = vmatprep.subr.mxu0 0.0
  %613 = vmatpush1.msra.mxu0 0.0
  %614 = vmatprep.subr.mxu0 0.0
  %615 = vmatpush1.msra.mxu0 0.0
  %616 = vmatprep.subr.mxu0 0.0
  %617 = vmatpush1.msra.mxu0 0.0
  %618 = vmatprep.subr.mxu0 0.0
  %619 = vmatpush1.msra.mxu0 0.0
  %620 = vmatprep.subr.mxu0 0.0
  %621 = vmatpush1.msra.mxu0 0.0
  %622 = vmatprep.subr.mxu0 0.0
  %623 = vmatpush1.msra.mxu0 0.0
  %624 = vmatprep.subr.mxu0 0.0
  %625 = vmatpush1.msra.mxu0 0.0
  %626 = vmatprep.subr.mxu0 0.0
  %627 = vmatpush1.msra.mxu0 0.0
  %628 = vmatprep.mubr.f32.mxu0 0.0
  %629 = vmatmul.mubr.f32.gmra.mrb[0].mxu0 %v85
  %v630 = vpop.f32.mrb[0].mxu0
  %v631 = vadd.f32 %v464, %v630
  %v632 = vpop.f32.mrb[0].mxu0
  %v633 = vadd.f32 %v468, %v632
  %634 = vdwg.mxu0
  %635 = vmatprep.subr.mxu0 %v360
  %636 = vmatpush1.msra.mxu0 %v359
  %637 = vmatprep.subr.mxu0 %v368
  %638 = vmatpush1.msra.mxu0 %v367
  %639 = vmatprep.subr.mxu0 %v376
  %640 = vmatpush1.msra.mxu0 %v375
  %641 = vmatprep.subr.mxu0 %v384
  %642 = vmatpush1.msra.mxu0 %v383
  %643 = vmatprep.subr.mxu0 %v392
  %644 = vmatpush1.msra.mxu0 %v391
  %645 = vmatprep.subr.mxu0 %v400
  %646 = vmatpush1.msra.mxu0 %v399
  %647 = vmatprep.subr.mxu0 %v408
  %648 = vmatpush1.msra.mxu0 %v407
  %649 = vmatprep.subr.mxu0 %v416
  %650 = vmatpush1.msra.mxu0 %v415
  %651 = vmatprep.subr.mxu0 %v424
  %652 = vmatpush1.msra.mxu0 %v423
  %653 = vmatprep.subr.mxu0 %v432
  %654 = vmatpush1.msra.mxu0 %v431
  %655 = vmatprep.subr.mxu0 %v440
  %656 = vmatpush1.msra.mxu0 %v439
  %657 = vmatprep.subr.mxu0 %v448
  %658 = vmatpush1.msra.mxu0 %v447
  %659 = vmatprep.subr.mxu0 0.0
  %660 = vmatpush1.msra.mxu0 0.0
  %661 = vmatprep.subr.mxu0 0.0
  %662 = vmatpush1.msra.mxu0 0.0
  %663 = vmatprep.subr.mxu0 0.0
  %664 = vmatpush1.msra.mxu0 0.0
  %665 = vmatprep.subr.mxu0 0.0
  %666 = vmatpush1.msra.mxu0 0.0
  %667 = vmatprep.subr.mxu0 0.0
  %668 = vmatpush1.msra.mxu0 0.0
  %669 = vmatprep.subr.mxu0 0.0
  %670 = vmatpush1.msra.mxu0 0.0
  %671 = vmatprep.subr.mxu0 0.0
  %672 = vmatpush1.msra.mxu0 0.0
  %673 = vmatprep.subr.mxu0 0.0
  %674 = vmatpush1.msra.mxu0 0.0
  %675 = vmatprep.subr.mxu0 0.0
  %676 = vmatpush1.msra.mxu0 0.0
  %677 = vmatprep.subr.mxu0 0.0
  %678 = vmatpush1.msra.mxu0 0.0
  %679 = vmatprep.subr.mxu0 0.0
  %680 = vmatpush1.msra.mxu0 0.0
  %681 = vmatprep.subr.mxu0 0.0
  %682 = vmatpush1.msra.mxu0 0.0
  %683 = vmatprep.subr.mxu0 0.0
  %684 = vmatpush1.msra.mxu0 0.0
  %685 = vmatprep.subr.mxu0 0.0
  %686 = vmatpush1.msra.mxu0 0.0
  %687 = vmatprep.subr.mxu0 0.0
  %688 = vmatpush1.msra.mxu0 0.0
  %689 = vmatprep.subr.mxu0 0.0
  %690 = vmatpush1.msra.mxu0 0.0
  %691 = vmatprep.subr.mxu0 0.0
  %692 = vmatpush1.msra.mxu0 0.0
  %693 = vmatprep.subr.mxu0 0.0
  %694 = vmatpush1.msra.mxu0 0.0
  %695 = vmatprep.subr.mxu0 0.0
  %696 = vmatpush1.msra.mxu0 0.0
  %697 = vmatprep.subr.mxu0 0.0
  %698 = vmatpush1.msra.mxu0 0.0
  %699 = vmatprep.mubr.f32.mxu0 0.0
  %700 = vmatmul.mubr.f32.gmra.mrb[0].mxu0 %v85
  %v701 = vpop.f32.mrb[0].mxu0
  %v702 = vadd.f32 %v472, %v701
  %v703 = vpop.f32.mrb[0].mxu0
  %v704 = vadd.f32 %v476, %v703
  %705 = vdwg.mxu0
  %706 = vmatprep.subr.mxu0 %v362
  %707 = vmatpush1.msra.mxu0 %v361
  %708 = vmatprep.subr.mxu0 %v370
  %709 = vmatpush1.msra.mxu0 %v369
  %710 = vmatprep.subr.mxu0 %v378
  %711 = vmatpush1.msra.mxu0 %v377
  %712 = vmatprep.subr.mxu0 %v386
  %713 = vmatpush1.msra.mxu0 %v385
  %714 = vmatprep.subr.mxu0 %v394
  %715 = vmatpush1.msra.mxu0 %v393
  %716 = vmatprep.subr.mxu0 %v402
  %717 = vmatpush1.msra.mxu0 %v401
  %718 = vmatprep.subr.mxu0 %v410
  %719 = vmatpush1.msra.mxu0 %v409
  %720 = vmatprep.subr.mxu0 %v418
  %721 = vmatpush1.msra.mxu0 %v417
  %722 = vmatprep.subr.mxu0 %v426
  %723 = vmatpush1.msra.mxu0 %v425
  %724 = vmatprep.subr.mxu0 %v434
  %725 = vmatpush1.msra.mxu0 %v433
  %726 = vmatprep.subr.mxu0 %v442
  %727 = vmatpush1.msra.mxu0 %v441
  %728 = vmatprep.subr.mxu0 %v450
  %729 = vmatpush1.msra.mxu0 %v449
  %730 = vmatprep.subr.mxu0 0.0
  %731 = vmatpush1.msra.mxu0 0.0
  %732 = vmatprep.subr.mxu0 0.0
  %733 = vmatpush1.msra.mxu0 0.0
  %734 = vmatprep.subr.mxu0 0.0
  %735 = vmatpush1.msra.mxu0 0.0
  %736 = vmatprep.subr.mxu0 0.0
  %737 = vmatpush1.msra.mxu0 0.0
  %738 = vmatprep.subr.mxu0 0.0
  %739 = vmatpush1.msra.mxu0 0.0
  %740 = vmatprep.subr.mxu0 0.0
  %741 = vmatpush1.msra.mxu0 0.0
  %742 = vmatprep.subr.mxu0 0.0
  %743 = vmatpush1.msra.mxu0 0.0
  %744 = vmatprep.subr.mxu0 0.0
  %745 = vmatpush1.msra.mxu0 0.0
  %746 = vmatprep.subr.mxu0 0.0
  %747 = vmatpush1.msra.mxu0 0.0
  %748 = vmatprep.subr.mxu0 0.0
  %749 = vmatpush1.msra.mxu0 0.0
  %750 = vmatprep.subr.mxu0 0.0
  %751 = vmatpush1.msra.mxu0 0.0
  %752 = vmatprep.subr.mxu0 0.0
  %753 = vmatpush1.msra.mxu0 0.0
  %754 = vmatprep.subr.mxu0 0.0
  %755 = vmatpush1.msra.mxu0 0.0
  %756 = vmatprep.subr.mxu0 0.0
  %757 = vmatpush1.msra.mxu0 0.0
  %758 = vmatprep.subr.mxu0 0.0
  %759 = vmatpush1.msra.mxu0 0.0
  %760 = vmatprep.subr.mxu0 0.0
  %761 = vmatpush1.msra.mxu0 0.0
  %762 = vmatprep.subr.mxu0 0.0
  %763 = vmatpush1.msra.mxu0 0.0
  %764 = vmatprep.subr.mxu0 0.0
  %765 = vmatpush1.msra.mxu0 0.0
  %766 = vmatprep.subr.mxu0 0.0
  %767 = vmatpush1.msra.mxu0 0.0
  %768 = vmatprep.subr.mxu0 0.0
  %769 = vmatpush1.msra.mxu0 0.0
  %770 = vmatprep.mubr.f32.mxu0 0.0
  %771 = vmatmul.mubr.f32.gmra.mrb[0].mxu0 %v85
  %v772 = vpop.f32.mrb[0].mxu0
  %v773 = vadd.f32 %v480, %v772
  %v774 = vpop.f32.mrb[0].mxu0
  %v775 = vadd.f32 %v484, %v774
  %776 = vdwg.mxu0
  %v777 = vld [vmem:[%s4] sm:$0xff]
  %v778 = vstv %s354
  %v779 = vmul.f32 %v778, %v777
  %v781 = vlaneseq
  %v782 = vshrl.u32 %v781, 7
  %v783 = vsub.s32 0, %v782
  %v784 = vrot.slane %v779, %v783
  %v785 = vlaneseq
  %v786 = vshrl.u32 %v785, 7
  %v787 = vsub.s32 1, %v786
  %v788 = vrot.slane %v779, %v787
  %v789 = vlaneseq
  %v790 = vshrl.u32 %v789, 7
  %v791 = vsub.s32 2, %v790
  %v792 = vrot.slane %v779, %v791
  %v793 = vlaneseq
  %v794 = vshrl.u32 %v793, 7
  %v795 = vsub.s32 3, %v794
  %v796 = vrot.slane %v779, %v795
  %v797 = vlaneseq
  %v798 = vshrl.u32 %v797, 7
  %v799 = vsub.s32 4, %v798
  %v800 = vrot.slane %v779, %v799
  %v801 = vlaneseq
  %v802 = vshrl.u32 %v801, 7
  %v803 = vsub.s32 5, %v802
  %v804 = vrot.slane %v779, %v803
  %v805 = vlaneseq
  %v806 = vshrl.u32 %v805, 7
  %v807 = vsub.s32 6, %v806
  %v808 = vrot.slane %v779, %v807
  %v809 = vlaneseq
  %v810 = vshrl.u32 %v809, 7
  %v811 = vsub.s32 7, %v810
  %v812 = vrot.slane %v779, %v811
  %v821 = vadd.f32 %v560, %v784
  %v822 = vadd.f32 %v562, %v788
  %v823 = vadd.f32 %v631, %v792
  %v824 = vadd.f32 %v633, %v796
  %v825 = vadd.f32 %v702, %v800
  %v826 = vadd.f32 %v704, %v804
  %v827 = vadd.f32 %v773, %v808
  %v828 = vadd.f32 %v775, %v812
  %vm829 = vcmp.ge.f32.partialorder %v821, 0.0
  %vm830 = vcmp.ge.f32.partialorder %v822, 0.0
  %vm831 = vcmp.ge.f32.partialorder %v823, 0.0
  %vm832 = vcmp.ge.f32.partialorder %v824, 0.0
  %vm833 = vcmp.ge.f32.partialorder %v825, 0.0
  %vm834 = vcmp.ge.f32.partialorder %v826, 0.0
  %vm835 = vcmp.ge.f32.partialorder %v827, 0.0
  %vm836 = vcmp.ge.f32.partialorder %v828, 0.0
  %v837 = vmul.f32 %v821, 0.2
  %v838 = vmul.f32 %v822, 0.2
  %v839 = vmul.f32 %v823, 0.2
  %v840 = vmul.f32 %v824, 0.2
  %v841 = vmul.f32 %v825, 0.2
  %v842 = vmul.f32 %v826, 0.2
  %v843 = vmul.f32 %v827, 0.2
  %v844 = vmul.f32 %v828, 0.2
  %v845 = vsel %vm829, %v821, %v837
  %v846 = vsel %vm830, %v822, %v838
  %v847 = vsel %vm831, %v823, %v839
  %v848 = vsel %vm832, %v824, %v840
  %v849 = vsel %vm833, %v825, %v841
  %v850 = vsel %vm834, %v826, %v842
  %v851 = vsel %vm835, %v827, %v843
  %v852 = vsel %vm836, %v828, %v844
  %v853 = vld [vmem:[%s5] sm:$0xff]
  %v854 = vld [vmem:[%s5 + $0x8] sm:$0xff]
  %v855 = vld [vmem:[%s5 + $0x10] sm:$0xff]
  %v856 = vld [vmem:[%s5 + $0x18] sm:$0xff]
  %v857 = vld [vmem:[%s5 + $0x20] sm:$0xff]
  %v858 = vld [vmem:[%s5 + $0x28] sm:$0xff]
  %v859 = vld [vmem:[%s5 + $0x30] sm:$0xff]
  %v860 = vld [vmem:[%s5 + $0x38] sm:$0xff]
  %v861 = vld [vmem:[%s5 + $0x40] sm:$0xff]
  %v862 = vld [vmem:[%s5 + $0x48] sm:$0xff]
  %v863 = vld [vmem:[%s5 + $0x50] sm:$0xff]
  %v864 = vld [vmem:[%s5 + $0x58] sm:$0xff]
  %v865 = vld [vmem:[%s5 + $0x60] sm:$0xff]
  %v866 = vld [vmem:[%s5 + $0x68] sm:$0xff]
  %v867 = vld [vmem:[%s5 + $0x70] sm:$0xff]
  %v868 = vld [vmem:[%s5 + $0x78] sm:$0xff]
  %v869 = vld [vmem:[%s5 + $0x80] sm:$0xff]
  %v870 = vld [vmem:[%s5 + $0x88] sm:$0xff]
  %v871 = vld [vmem:[%s5 + $0x90] sm:$0xff]
  %v872 = vld [vmem:[%s5 + $0x98] sm:$0xff]
  %v873 = vld [vmem:[%s5 + $0xa0] sm:$0xff]
  %v874 = vld [vmem:[%s5 + $0xa8] sm:$0xff]
  %v875 = vld [vmem:[%s5 + $0xb0] sm:$0xff]
  %v876 = vld [vmem:[%s5 + $0xb8] sm:$0xff]
  %v877 = vld [vmem:[%s5 + $0xc0] sm:$0xff]
  %v878 = vld [vmem:[%s5 + $0xc8] sm:$0xff]
  %v879 = vld [vmem:[%s5 + $0xd0] sm:$0xff]
  %v880 = vld [vmem:[%s5 + $0xd8] sm:$0xff]
  %v881 = vld [vmem:[%s5 + $0xe0] sm:$0xff]
  %v882 = vld [vmem:[%s5 + $0xe8] sm:$0xff]
  %v883 = vld [vmem:[%s5 + $0xf0] sm:$0xff]
  %v884 = vld [vmem:[%s5 + $0xf8] sm:$0xff]
  %v885 = vld [vmem:[%s5 + $0x100] sm:$0xff]
  %v886 = vld [vmem:[%s5 + $0x108] sm:$0xff]
  %v887 = vld [vmem:[%s5 + $0x110] sm:$0xff]
  %v888 = vld [vmem:[%s5 + $0x118] sm:$0xff]
  %v889 = vld [vmem:[%s5 + $0x120] sm:$0xff]
  %v890 = vld [vmem:[%s5 + $0x128] sm:$0xff]
  %v891 = vld [vmem:[%s5 + $0x130] sm:$0xff]
  %v892 = vld [vmem:[%s5 + $0x138] sm:$0xff]
  %v893 = vld [vmem:[%s5 + $0x140] sm:$0xff]
  %v894 = vld [vmem:[%s5 + $0x148] sm:$0xff]
  %v895 = vld [vmem:[%s5 + $0x150] sm:$0xff]
  %v896 = vld [vmem:[%s5 + $0x158] sm:$0xff]
  %v897 = vld [vmem:[%s5 + $0x160] sm:$0xff]
  %v898 = vld [vmem:[%s5 + $0x168] sm:$0xff]
  %v899 = vld [vmem:[%s5 + $0x170] sm:$0xff]
  %v900 = vld [vmem:[%s5 + $0x178] sm:$0xff]
  %v901 = vld [vmem:[%s5 + $0x180] sm:$0xff]
  %v902 = vld [vmem:[%s5 + $0x188] sm:$0xff]
  %v903 = vld [vmem:[%s5 + $0x190] sm:$0xff]
  %v904 = vld [vmem:[%s5 + $0x198] sm:$0xff]
  %v905 = vld [vmem:[%s5 + $0x1a0] sm:$0xff]
  %v906 = vld [vmem:[%s5 + $0x1a8] sm:$0xff]
  %v907 = vld [vmem:[%s5 + $0x1b0] sm:$0xff]
  %v908 = vld [vmem:[%s5 + $0x1b8] sm:$0xff]
  %v909 = vld [vmem:[%s5 + $0x1c0] sm:$0xff]
  %v910 = vld [vmem:[%s5 + $0x1c8] sm:$0xff]
  %v911 = vld [vmem:[%s5 + $0x1d0] sm:$0xff]
  %v912 = vld [vmem:[%s5 + $0x1d8] sm:$0xff]
  %v913 = vld [vmem:[%s5 + $0x1e0] sm:$0xff]
  %v914 = vld [vmem:[%s5 + $0x1e8] sm:$0xff]
  %v915 = vld [vmem:[%s5 + $0x1f0] sm:$0xff]
  %v916 = vld [vmem:[%s5 + $0x1f8] sm:$0xff]
  %v917 = vld [vmem:[%s5 + $0x200] sm:$0xff]
  %v918 = vld [vmem:[%s5 + $0x208] sm:$0xff]
  %v919 = vld [vmem:[%s5 + $0x210] sm:$0xff]
  %v920 = vld [vmem:[%s5 + $0x218] sm:$0xff]
  %v921 = vld [vmem:[%s5 + $0x220] sm:$0xff]
  %v922 = vld [vmem:[%s5 + $0x228] sm:$0xff]
  %v923 = vld [vmem:[%s5 + $0x230] sm:$0xff]
  %v924 = vld [vmem:[%s5 + $0x238] sm:$0xff]
  %v925 = vld [vmem:[%s5 + $0x240] sm:$0xff]
  %v926 = vld [vmem:[%s5 + $0x248] sm:$0xff]
  %v927 = vld [vmem:[%s5 + $0x250] sm:$0xff]
  %v928 = vld [vmem:[%s5 + $0x258] sm:$0xff]
  %v929 = vld [vmem:[%s5 + $0x260] sm:$0xff]
  %v930 = vld [vmem:[%s5 + $0x268] sm:$0xff]
  %v931 = vld [vmem:[%s5 + $0x270] sm:$0xff]
  %v932 = vld [vmem:[%s5 + $0x278] sm:$0xff]
  %v933 = vld [vmem:[%s5 + $0x280] sm:$0xff]
  %v934 = vld [vmem:[%s5 + $0x288] sm:$0xff]
  %v935 = vld [vmem:[%s5 + $0x290] sm:$0xff]
  %v936 = vld [vmem:[%s5 + $0x298] sm:$0xff]
  %v937 = vld [vmem:[%s5 + $0x2a0] sm:$0xff]
  %v938 = vld [vmem:[%s5 + $0x2a8] sm:$0xff]
  %v939 = vld [vmem:[%s5 + $0x2b0] sm:$0xff]
  %v940 = vld [vmem:[%s5 + $0x2b8] sm:$0xff]
  %v941 = vld [vmem:[%s5 + $0x2c0] sm:$0xff]
  %v942 = vld [vmem:[%s5 + $0x2c8] sm:$0xff]
  %v943 = vld [vmem:[%s5 + $0x2d0] sm:$0xff]
  %v944 = vld [vmem:[%s5 + $0x2d8] sm:$0xff]
  %v945 = vld [vmem:[%s5 + $0x2e0] sm:$0xff]
  %v946 = vld [vmem:[%s5 + $0x2e8] sm:$0xff]
  %v947 = vld [vmem:[%s5 + $0x2f0] sm:$0xff]
  %v948 = vld [vmem:[%s5 + $0x2f8] sm:$0xff]
  %v949 = vld [vmem:[%s5 + $0x300] sm:$0xff]
  %v950 = vld [vmem:[%s5 + $0x308] sm:$0xff]
  %v951 = vld [vmem:[%s5 + $0x310] sm:$0xff]
  %v952 = vld [vmem:[%s5 + $0x318] sm:$0xff]
  %v953 = vld [vmem:[%s5 + $0x320] sm:$0xff]
  %v954 = vld [vmem:[%s5 + $0x328] sm:$0xff]
  %v955 = vld [vmem:[%s5 + $0x330] sm:$0xff]
  %v956 = vld [vmem:[%s5 + $0x338] sm:$0xff]
  %v957 = vld [vmem:[%s5 + $0x340] sm:$0xff]
  %v958 = vld [vmem:[%s5 + $0x348] sm:$0xff]
  %v959 = vld [vmem:[%s5 + $0x350] sm:$0xff]
  %v960 = vld [vmem:[%s5 + $0x358] sm:$0xff]
  %v961 = vld [vmem:[%s5 + $0x360] sm:$0xff]
  %v962 = vld [vmem:[%s5 + $0x368] sm:$0xff]
  %v963 = vld [vmem:[%s5 + $0x370] sm:$0xff]
  %v964 = vld [vmem:[%s5 + $0x378] sm:$0xff]
  %v965 = vld [vmem:[%s5 + $0x380] sm:$0xff]
  %v966 = vld [vmem:[%s5 + $0x388] sm:$0xff]
  %v967 = vld [vmem:[%s5 + $0x390] sm:$0xff]
  %v968 = vld [vmem:[%s5 + $0x398] sm:$0xff]
  %v969 = vld [vmem:[%s5 + $0x3a0] sm:$0xff]
  %v970 = vld [vmem:[%s5 + $0x3a8] sm:$0xff]
  %v971 = vld [vmem:[%s5 + $0x3b0] sm:$0xff]
  %v972 = vld [vmem:[%s5 + $0x3b8] sm:$0xff]
  %v973 = vld [vmem:[%s5 + $0x3c0] sm:$0xff]
  %v974 = vld [vmem:[%s5 + $0x3c8] sm:$0xff]
  %v975 = vld [vmem:[%s5 + $0x3d0] sm:$0xff]
  %v976 = vld [vmem:[%s5 + $0x3d8] sm:$0xff]
  %v977 = vld [vmem:[%s5 + $0x3e0] sm:$0xff]
  %v978 = vld [vmem:[%s5 + $0x3e8] sm:$0xff]
  %v979 = vld [vmem:[%s5 + $0x3f0] sm:$0xff]
  %v980 = vld [vmem:[%s5 + $0x3f8] sm:$0xff]
  %v981 = vld [vmem:[%s6] sm:$0x1]
  %v983 = vlaneseq
  %v984 = vshrl.u32 %v983, 7
  %v985 = vsub.s32 0, %v984
  %v986 = vrot.slane %v981, %v985
  %988 = vmatprep.subr.mxu0 0.0
  %989 = vmatpush1.msra.mxu0 %v853
  %990 = vmatprep.subr.mxu0 0.0
  %991 = vmatpush1.msra.mxu0 %v854
  %992 = vmatprep.subr.mxu0 0.0
  %993 = vmatpush1.msra.mxu0 %v855
  %994 = vmatprep.subr.mxu0 0.0
  %995 = vmatpush1.msra.mxu0 %v856
  %996 = vmatprep.subr.mxu0 0.0
  %997 = vmatpush1.msra.mxu0 %v857
  %998 = vmatprep.subr.mxu0 0.0
  %999 = vmatpush1.msra.mxu0 %v858
  %1000 = vmatprep.subr.mxu0 0.0
  %1001 = vmatpush1.msra.mxu0 %v859
  %1002 = vmatprep.subr.mxu0 0.0
  %1003 = vmatpush1.msra.mxu0 %v860
  %1004 = vmatprep.subr.mxu0 0.0
  %1005 = vmatpush1.msra.mxu0 %v861
  %1006 = vmatprep.subr.mxu0 0.0
  %1007 = vmatpush1.msra.mxu0 %v862
  %1008 = vmatprep.subr.mxu0 0.0
  %1009 = vmatpush1.msra.mxu0 %v863
  %1010 = vmatprep.subr.mxu0 0.0
  %1011 = vmatpush1.msra.mxu0 %v864
  %1012 = vmatprep.subr.mxu0 0.0
  %1013 = vmatpush1.msra.mxu0 %v865
  %1014 = vmatprep.subr.mxu0 0.0
  %1015 = vmatpush1.msra.mxu0 %v866
  %1016 = vmatprep.subr.mxu0 0.0
  %1017 = vmatpush1.msra.mxu0 %v867
  %1018 = vmatprep.subr.mxu0 0.0
  %1019 = vmatpush1.msra.mxu0 %v868
  %1020 = vmatprep.subr.mxu0 0.0
  %1021 = vmatpush1.msra.mxu0 %v869
  %1022 = vmatprep.subr.mxu0 0.0
  %1023 = vmatpush1.msra.mxu0 %v870
  %1024 = vmatprep.subr.mxu0 0.0
  %1025 = vmatpush1.msra.mxu0 %v871
  %1026 = vmatprep.subr.mxu0 0.0
  %1027 = vmatpush1.msra.mxu0 %v872
  %1028 = vmatprep.subr.mxu0 0.0
  %1029 = vmatpush1.msra.mxu0 %v873
  %1030 = vmatprep.subr.mxu0 0.0
  %1031 = vmatpush1.msra.mxu0 %v874
  %1032 = vmatprep.subr.mxu0 0.0
  %1033 = vmatpush1.msra.mxu0 %v875
  %1034 = vmatprep.subr.mxu0 0.0
  %1035 = vmatpush1.msra.mxu0 %v876
  %1036 = vmatprep.subr.mxu0 0.0
  %1037 = vmatpush1.msra.mxu0 %v877
  %1038 = vmatprep.subr.mxu0 0.0
  %1039 = vmatpush1.msra.mxu0 %v878
  %1040 = vmatprep.subr.mxu0 0.0
  %1041 = vmatpush1.msra.mxu0 %v879
  %1042 = vmatprep.subr.mxu0 0.0
  %1043 = vmatpush1.msra.mxu0 %v880
  %1044 = vmatprep.subr.mxu0 0.0
  %1045 = vmatpush1.msra.mxu0 %v881
  %1046 = vmatprep.subr.mxu0 0.0
  %1047 = vmatpush1.msra.mxu0 %v882
  %1048 = vmatprep.subr.mxu0 0.0
  %1049 = vmatpush1.msra.mxu0 %v883
  %1050 = vmatprep.subr.mxu0 0.0
  %1051 = vmatpush1.msra.mxu0 %v884
  %1052 = vmatprep.mubr.f32.mxu0 %v846
  %1053 = vmatmul.mubr.f32.gmra.mrb[0].mxu0 %v845
  %v1054 = vpop.f32.mrb[0].mxu0
  %v1055 = vadd.f32 %v986, %v1054
  %v1056 = vpop.f32.mrb[0].mxu0
  %1057 = vdwg.mxu0
  %1058 = vmatprep.subr.mxu0 0.0
  %1059 = vmatpush1.msra.mxu0 %v885
  %1060 = vmatprep.subr.mxu0 0.0
  %1061 = vmatpush1.msra.mxu0 %v886
  %1062 = vmatprep.subr.mxu0 0.0
  %1063 = vmatpush1.msra.mxu0 %v887
  %1064 = vmatprep.subr.mxu0 0.0
  %1065 = vmatpush1.msra.mxu0 %v888
  %1066 = vmatprep.subr.mxu0 0.0
  %1067 = vmatpush1.msra.mxu0 %v889
  %1068 = vmatprep.subr.mxu0 0.0
  %1069 = vmatpush1.msra.mxu0 %v890
  %1070 = vmatprep.subr.mxu0 0.0
  %1071 = vmatpush1.msra.mxu0 %v891
  %1072 = vmatprep.subr.mxu0 0.0
  %1073 = vmatpush1.msra.mxu0 %v892
  %1074 = vmatprep.subr.mxu0 0.0
  %1075 = vmatpush1.msra.mxu0 %v893
  %1076 = vmatprep.subr.mxu0 0.0
  %1077 = vmatpush1.msra.mxu0 %v894
  %1078 = vmatprep.subr.mxu0 0.0
  %1079 = vmatpush1.msra.mxu0 %v895
  %1080 = vmatprep.subr.mxu0 0.0
  %1081 = vmatpush1.msra.mxu0 %v896
  %1082 = vmatprep.subr.mxu0 0.0
  %1083 = vmatpush1.msra.mxu0 %v897
  %1084 = vmatprep.subr.mxu0 0.0
  %1085 = vmatpush1.msra.mxu0 %v898
  %1086 = vmatprep.subr.mxu0 0.0
  %1087 = vmatpush1.msra.mxu0 %v899
  %1088 = vmatprep.subr.mxu0 0.0
  %1089 = vmatpush1.msra.mxu0 %v900
  %1090 = vmatprep.subr.mxu0 0.0
  %1091 = vmatpush1.msra.mxu0 %v901
  %1092 = vmatprep.subr.mxu0 0.0
  %1093 = vmatpush1.msra.mxu0 %v902
  %1094 = vmatprep.subr.mxu0 0.0
  %1095 = vmatpush1.msra.mxu0 %v903
  %1096 = vmatprep.subr.mxu0 0.0
  %1097 = vmatpush1.msra.mxu0 %v904
  %1098 = vmatprep.subr.mxu0 0.0
  %1099 = vmatpush1.msra.mxu0 %v905
  %1100 = vmatprep.subr.mxu0 0.0
  %1101 = vmatpush1.msra.mxu0 %v906
  %1102 = vmatprep.subr.mxu0 0.0
  %1103 = vmatpush1.msra.mxu0 %v907
  %1104 = vmatprep.subr.mxu0 0.0
  %1105 = vmatpush1.msra.mxu0 %v908
  %1106 = vmatprep.subr.mxu0 0.0
  %1107 = vmatpush1.msra.mxu0 %v909
  %1108 = vmatprep.subr.mxu0 0.0
  %1109 = vmatpush1.msra.mxu0 %v910
  %1110 = vmatprep.subr.mxu0 0.0
  %1111 = vmatpush1.msra.mxu0 %v911
  %1112 = vmatprep.subr.mxu0 0.0
  %1113 = vmatpush1.msra.mxu0 %v912
  %1114 = vmatprep.subr.mxu0 0.0
  %1115 = vmatpush1.msra.mxu0 %v913
  %1116 = vmatprep.subr.mxu0 0.0
  %1117 = vmatpush1.msra.mxu0 %v914
  %1118 = vmatprep.subr.mxu0 0.0
  %1119 = vmatpush1.msra.mxu0 %v915
  %1120 = vmatprep.subr.mxu0 0.0
  %1121 = vmatpush1.msra.mxu0 %v916
  %1122 = vmatprep.mubr.f32.mxu0 %v848
  %1123 = vmatmul.mubr.f32.gmra.mrb[0].mxu0 %v847
  %v1124 = vpop.f32.mrb[0].mxu0
  %v1125 = vadd.f32 %v1055, %v1124
  %v1126 = vpop.f32.mrb[0].mxu0
  %1127 = vdwg.mxu0
  %1128 = vmatprep.subr.mxu0 0.0
  %1129 = vmatpush1.msra.mxu0 %v917
  %1130 = vmatprep.subr.mxu0 0.0
  %1131 = vmatpush1.msra.mxu0 %v918
  %1132 = vmatprep.subr.mxu0 0.0
  %1133 = vmatpush1.msra.mxu0 %v919
  %1134 = vmatprep.subr.mxu0 0.0
  %1135 = vmatpush1.msra.mxu0 %v920
  %1136 = vmatprep.subr.mxu0 0.0
  %1137 = vmatpush1.msra.mxu0 %v921
  %1138 = vmatprep.subr.mxu0 0.0
  %1139 = vmatpush1.msra.mxu0 %v922
  %1140 = vmatprep.subr.mxu0 0.0
  %1141 = vmatpush1.msra.mxu0 %v923
  %1142 = vmatprep.subr.mxu0 0.0
  %1143 = vmatpush1.msra.mxu0 %v924
  %1144 = vmatprep.subr.mxu0 0.0
  %1145 = vmatpush1.msra.mxu0 %v925
  %1146 = vmatprep.subr.mxu0 0.0
  %1147 = vmatpush1.msra.mxu0 %v926
  %1148 = vmatprep.subr.mxu0 0.0
  %1149 = vmatpush1.msra.mxu0 %v927
  %1150 = vmatprep.subr.mxu0 0.0
  %1151 = vmatpush1.msra.mxu0 %v928
  %1152 = vmatprep.subr.mxu0 0.0
  %1153 = vmatpush1.msra.mxu0 %v929
  %1154 = vmatprep.subr.mxu0 0.0
  %1155 = vmatpush1.msra.mxu0 %v930
  %1156 = vmatprep.subr.mxu0 0.0
  %1157 = vmatpush1.msra.mxu0 %v931
  %1158 = vmatprep.subr.mxu0 0.0
  %1159 = vmatpush1.msra.mxu0 %v932
  %1160 = vmatprep.subr.mxu0 0.0
  %1161 = vmatpush1.msra.mxu0 %v933
  %1162 = vmatprep.subr.mxu0 0.0
  %1163 = vmatpush1.msra.mxu0 %v934
  %1164 = vmatprep.subr.mxu0 0.0
  %1165 = vmatpush1.msra.mxu0 %v935
  %1166 = vmatprep.subr.mxu0 0.0
  %1167 = vmatpush1.msra.mxu0 %v936
  %1168 = vmatprep.subr.mxu0 0.0
  %1169 = vmatpush1.msra.mxu0 %v937
  %1170 = vmatprep.subr.mxu0 0.0
  %1171 = vmatpush1.msra.mxu0 %v938
  %1172 = vmatprep.subr.mxu0 0.0
  %1173 = vmatpush1.msra.mxu0 %v939
  %1174 = vmatprep.subr.mxu0 0.0
  %1175 = vmatpush1.msra.mxu0 %v940
  %1176 = vmatprep.subr.mxu0 0.0
  %1177 = vmatpush1.msra.mxu0 %v941
  %1178 = vmatprep.subr.mxu0 0.0
  %1179 = vmatpush1.msra.mxu0 %v942
  %1180 = vmatprep.subr.mxu0 0.0
  %1181 = vmatpush1.msra.mxu0 %v943
  %1182 = vmatprep.subr.mxu0 0.0
  %1183 = vmatpush1.msra.mxu0 %v944
  %1184 = vmatprep.subr.mxu0 0.0
  %1185 = vmatpush1.msra.mxu0 %v945
  %1186 = vmatprep.subr.mxu0 0.0
  %1187 = vmatpush1.msra.mxu0 %v946
  %1188 = vmatprep.subr.mxu0 0.0
  %1189 = vmatpush1.msra.mxu0 %v947
  %1190 = vmatprep.subr.mxu0 0.0
  %1191 = vmatpush1.msra.mxu0 %v948
  %1192 = vmatprep.mubr.f32.mxu0 %v850
  %1193 = vmatmul.mubr.f32.gmra.mrb[0].mxu0 %v849
  %v1194 = vpop.f32.mrb[0].mxu0
  %v1195 = vadd.f32 %v1125, %v1194
  %v1196 = vpop.f32.mrb[0].mxu0
  %1197 = vdwg.mxu0
  %1198 = vmatprep.subr.mxu0 0.0
  %1199 = vmatpush1.msra.mxu0 %v949
  %1200 = vmatprep.subr.mxu0 0.0
  %1201 = vmatpush1.msra.mxu0 %v950
  %1202 = vmatprep.subr.mxu0 0.0
  %1203 = vmatpush1.msra.mxu0 %v951
  %1204 = vmatprep.subr.mxu0 0.0
  %1205 = vmatpush1.msra.mxu0 %v952
  %1206 = vmatprep.subr.mxu0 0.0
  %1207 = vmatpush1.msra.mxu0 %v953
  %1208 = vmatprep.subr.mxu0 0.0
  %1209 = vmatpush1.msra.mxu0 %v954
  %1210 = vmatprep.subr.mxu0 0.0
  %1211 = vmatpush1.msra.mxu0 %v955
  %1212 = vmatprep.subr.mxu0 0.0
  %1213 = vmatpush1.msra.mxu0 %v956
  %1214 = vmatprep.subr.mxu0 0.0
  %1215 = vmatpush1.msra.mxu0 %v957
  %1216 = vmatprep.subr.mxu0 0.0
  %1217 = vmatpush1.msra.mxu0 %v958
  %1218 = vmatprep.subr.mxu0 0.0
  %1219 = vmatpush1.msra.mxu0 %v959
  %1220 = vmatprep.subr.mxu0 0.0
  %1221 = vmatpush1.msra.mxu0 %v960
  %1222 = vmatprep.subr.mxu0 0.0
  %1223 = vmatpush1.msra.mxu0 %v961
  %1224 = vmatprep.subr.mxu0 0.0
  %1225 = vmatpush1.msra.mxu0 %v962
  %1226 = vmatprep.subr.mxu0 0.0
  %1227 = vmatpush1.msra.mxu0 %v963
  %1228 = vmatprep.subr.mxu0 0.0
  %1229 = vmatpush1.msra.mxu0 %v964
  %1230 = vmatprep.subr.mxu0 0.0
  %1231 = vmatpush1.msra.mxu0 %v965
  %1232 = vmatprep.subr.mxu0 0.0
  %1233 = vmatpush1.msra.mxu0 %v966
  %1234 = vmatprep.subr.mxu0 0.0
  %1235 = vmatpush1.msra.mxu0 %v967
  %1236 = vmatprep.subr.mxu0 0.0
  %1237 = vmatpush1.msra.mxu0 %v968
  %1238 = vmatprep.subr.mxu0 0.0
  %1239 = vmatpush1.msra.mxu0 %v969
  %1240 = vmatprep.subr.mxu0 0.0
  %1241 = vmatpush1.msra.mxu0 %v970
  %1242 = vmatprep.subr.mxu0 0.0
  %1243 = vmatpush1.msra.mxu0 %v971
  %1244 = vmatprep.subr.mxu0 0.0
  %1245 = vmatpush1.msra.mxu0 %v972
  %1246 = vmatprep.subr.mxu0 0.0
  %1247 = vmatpush1.msra.mxu0 %v973
  %1248 = vmatprep.subr.mxu0 0.0
  %1249 = vmatpush1.msra.mxu0 %v974
  %1250 = vmatprep.subr.mxu0 0.0
  %1251 = vmatpush1.msra.mxu0 %v975
  %1252 = vmatprep.subr.mxu0 0.0
  %1253 = vmatpush1.msra.mxu0 %v976
  %1254 = vmatprep.subr.mxu0 0.0
  %1255 = vmatpush1.msra.mxu0 %v977
  %1256 = vmatprep.subr.mxu0 0.0
  %1257 = vmatpush1.msra.mxu0 %v978
  %1258 = vmatprep.subr.mxu0 0.0
  %1259 = vmatpush1.msra.mxu0 %v979
  %1260 = vmatprep.subr.mxu0 0.0
  %1261 = vmatpush1.msra.mxu0 %v980
  %1262 = vmatprep.mubr.f32.mxu0 %v852
  %1263 = vmatmul.mubr.f32.gmra.mrb[0].mxu0 %v851
  %v1264 = vpop.f32.mrb[0].mxu0
  %v1265 = vadd.f32 %v1195, %v1264
  %v1266 = vpop.f32.mrb[0].mxu0
  %1267 = vdwg.mxu0
  %vm1268 = vcmp.ge.f32.partialorder %v1265, 0.0
  %v1269 = vmul.f32 %v1265, 0.2
  %v1270 = vsel %vm1268, %v1265, %v1269
  %v1271 = vld [vmem:[%s7] sm:$0xff]
  %v1272 = vld [vmem:[%s7 + $0x8] sm:$0xff]
  %v1273 = vld [vmem:[%s7 + $0x10] sm:$0xff]
  %v1274 = vld [vmem:[%s7 + $0x18] sm:$0xff]
  %v1275 = vld [vmem:[%s7 + $0x20] sm:$0xff]
  %v1276 = vld [vmem:[%s7 + $0x28] sm:$0xff]
  %v1277 = vld [vmem:[%s7 + $0x30] sm:$0xff]
  %v1278 = vld [vmem:[%s7 + $0x38] sm:$0xff]
  %v1279 = vld [vmem:[#allocation2] sm:$0x1]
  %v1281 = vlaneseq
  %v1282 = vshrl.u32 %v1281, 7
  %v1283 = vsub.s32 0, %v1282
  %v1284 = vrot.slane %v1279, %v1283
  %vm1286 = vcmask 523264
  %v1288 = vsel %vm1286, %v1270, 0
  %1290 = vmatprep.subr.mxu0 0.0
  %1291 = vmatpush1.msra.mxu0 %v1271
  %1292 = vmatprep.subr.mxu0 0.0
  %1293 = vmatpush1.msra.mxu0 %v1272
  %1294 = vmatprep.subr.mxu0 0.0
  %1295 = vmatpush1.msra.mxu0 %v1273
  %1296 = vmatprep.subr.mxu0 0.0
  %1297 = vmatpush1.msra.mxu0 %v1274
  %1298 = vmatprep.subr.mxu0 0.0
  %1299 = vmatpush1.msra.mxu0 %v1275
  %1300 = vmatprep.subr.mxu0 0.0
  %1301 = vmatpush1.msra.mxu0 %v1276
  %1302 = vmatprep.subr.mxu0 0.0
  %1303 = vmatpush1.msra.mxu0 %v1277
  %1304 = vmatprep.subr.mxu0 0.0
  %1305 = vmatpush1.msra.mxu0 %v1278
  %1306 = vmatprep.subr.mxu0 0.0
  %1307 = vmatpush1.msra.mxu0 0.0
  %1308 = vmatprep.subr.mxu0 0.0
  %1309 = vmatpush1.msra.mxu0 0.0
  %1310 = vmatprep.subr.mxu0 0.0
  %1311 = vmatpush1.msra.mxu0 0.0
  %1312 = vmatprep.subr.mxu0 0.0
  %1313 = vmatpush1.msra.mxu0 0.0
  %1314 = vmatprep.subr.mxu0 0.0
  %1315 = vmatpush1.msra.mxu0 0.0
  %1316 = vmatprep.subr.mxu0 0.0
  %1317 = vmatpush1.msra.mxu0 0.0
  %1318 = vmatprep.subr.mxu0 0.0
  %1319 = vmatpush1.msra.mxu0 0.0
  %1320 = vmatprep.subr.mxu0 0.0
  %1321 = vmatpush1.msra.mxu0 0.0
  %1322 = vmatprep.subr.mxu0 0.0
  %1323 = vmatpush1.msra.mxu0 0.0
  %1324 = vmatprep.subr.mxu0 0.0
  %1325 = vmatpush1.msra.mxu0 0.0
  %1326 = vmatprep.subr.mxu0 0.0
  %1327 = vmatpush1.msra.mxu0 0.0
  %1328 = vmatprep.subr.mxu0 0.0
  %1329 = vmatpush1.msra.mxu0 0.0
  %1330 = vmatprep.subr.mxu0 0.0
  %1331 = vmatpush1.msra.mxu0 0.0
  %1332 = vmatprep.subr.mxu0 0.0
  %1333 = vmatpush1.msra.mxu0 0.0
  %1334 = vmatprep.subr.mxu0 0.0
  %1335 = vmatpush1.msra.mxu0 0.0
  %1336 = vmatprep.subr.mxu0 0.0
  %1337 = vmatpush1.msra.mxu0 0.0
  %1338 = vmatprep.subr.mxu0 0.0
  %1339 = vmatpush1.msra.mxu0 0.0
  %1340 = vmatprep.subr.mxu0 0.0
  %1341 = vmatpush1.msra.mxu0 0.0
  %1342 = vmatprep.subr.mxu0 0.0
  %1343 = vmatpush1.msra.mxu0 0.0
  %1344 = vmatprep.subr.mxu0 0.0
  %1345 = vmatpush1.msra.mxu0 0.0
  %1346 = vmatprep.subr.mxu0 0.0
  %1347 = vmatpush1.msra.mxu0 0.0
  %1348 = vmatprep.subr.mxu0 0.0
  %1349 = vmatpush1.msra.mxu0 0.0
  %1350 = vmatprep.subr.mxu0 0.0
  %1351 = vmatpush1.msra.mxu0 0.0
  %1352 = vmatprep.subr.mxu0 0.0
  %1353 = vmatpush1.msra.mxu0 0.0
  %1354 = vmatprep.mubr.f32.mxu0 0.0
  %1355 = vmatmul.mubr.f32.gmra.mrb[0].mxu0 %v1288
  %v1356 = vpop.f32.mrb[0].mxu0
  %v1357 = vadd.f32 %v1284, %v1356
  %v1358 = vpop.f32.mrb[0].mxu0
  %1359 = vdwg.mxu0
  %vm1360 = vcmask 1024
  %1361 = vst.msk [vmem:[%s9] sm:$0x3] %vm1360, %v1357
  // Predicated region
  $region38: #{nframes_discriminator_forward.1} parent=0 // pred_check
    _
  $region39: #{nframes_discriminator_forward.1} parent=0 // pred_check_branch
    %1363 = sbr.rel (0) target = $region41
  $region40: #{nframes_discriminator_forward.1} parent=0 // pred_region
    _
  $region41: #{nframes_discriminator_forward.1} parent=0 // pred_fallthru
    _
  // Predicated region
  $region42: #{nframes_discriminator_forward.1} parent=0 // pred_check
    _
  $region43: #{nframes_discriminator_forward.1} parent=0 // pred_check_branch
    %1365 = sbr.rel (0) target = $region45
  $region44: #{nframes_discriminator_forward.1} parent=0 // pred_region
    _
  $region45: #{nframes_discriminator_forward.1} parent=0 // pred_fallthru
    _

</llo_original>
